<compile_context>
chip_gen: v5e
topology: v5e:2x2
jax: 0.10.0
libtpu: 0.0.40
codegen_flags: <defaults>
</compile_context>

<pallas_src>
import math
from functools import partial

import jax
import jax.numpy as jnp
from jax import lax
from jax.experimental import pallas as pl
from jax.experimental.pallas import tpu as pltpu


def _round_up(x, m):
    return ((x + m - 1) // m) * m


def _vmem_capacity_bytes():
    """Physical VMEM of the local TPU (fallback: v7x-sized 64 MiB, safe everywhere)."""
    try:
        return int(pltpu.get_tpu_info().vmem_capacity_bytes)
    except Exception:
        return 64 * 1024 * 1024


def _same_pad_nhwc(x_nhwc, kh, kw, sh, sw):
    """TF-SAME padding on NHWC, replicating F.pad semantics (negative pads crop)."""
    _, h, w, _ = x_nhwc.shape
    extra_h = (math.ceil(w / sw) - 1) * sw - w + kw
    extra_v = (math.ceil(h / sh) - 1) * sh - h + kh
    left = extra_h // 2
    right = extra_h - left
    top = extra_v // 2
    bottom = extra_v - top
    crop_t, crop_b = max(-top, 0), max(-bottom, 0)
    crop_l, crop_r = max(-left, 0), max(-right, 0)
    x_nhwc = x_nhwc[:, crop_t:h - crop_b, crop_l:w - crop_r, :]
    return jnp.pad(x_nhwc, ((0, 0),
                            (max(top, 0), max(bottom, 0)),
                            (max(left, 0), max(right, 0)),
                            (0, 0)))


def _choose_tile_oh(oh, ow, per_m_bytes, fixed_bytes, budget, m_cap=1024):
    """Pick TILE_OH: whole OH if it fits, else the largest multiple of 8 whose VMEM
    estimate stays under the budget (multiple-of-8 keeps the output block
    sublane-aligned so partial tiles stay legal)."""
    def fits(t):
        return fixed_bytes + t * ow * per_m_bytes <= budget
    if oh * ow <= m_cap and fits(oh):
        return oh
    t = min((oh // 8) * 8, max(8, (m_cap // max(ow, 1)) // 8 * 8))
    while t >= 8:
        if fits(t):
            return t
        t -= 8
    # TODO(synk): block too large for residency -> would need row-window manual DMA.
    return min(oh, 8)


def _conv_slab_kernel(x_ref, w_ref, b_ref, o_ref, slab_ref, *,
                      KH, KW, SH, SW, TILE_OH, OW, CIN, K, K_PAD, HAS_BIAS):
    """Small-CIN path: direct-store im2col into a lane-dense slab + one MXU matmul.

    x_ref : (SH, SW, Hp_ph, Wp_ph, CIN) stride-phase image, resident across row tiles.
    w_ref : (K_PAD, COUT_PAD) folded weights (zero-padded K rows).
    b_ref : (1, COUT_PAD) bias.
    o_ref : (TILE_OH*OW, COUT_PAD) lane-dense output tile.
    slab  : (TILE_OH, OW, K_PAD) persistent VMEM im2col scratch.
    """
    t = pl.program_id(1)
    row0 = t * TILE_OH

    # Stale VMEM in the K-padding lanes could hold NaN/Inf (NaN * 0-weight = NaN),
    # so clear just the pad lanes (<=127 columns) before the MXU sees them.
    if K_PAD > K:
        slab_ref[:, :, K:] = jnp.zeros((TILE_OH, OW, K_PAD - K), slab_ref.dtype)

    # Direct-store im2col: one contiguous load per (kh, kw) tap, written straight
    # into its column block of the 128-aligned slab (no concatenate, no K reshape).
    for kh in range(KH):
        ph, roff = kh % SH, kh // SH
        for kw in range(KW):
            pw, coff = kw % SW, kw // SW
            tap = kh * KW + kw
            slab_ref[:, :, tap * CIN:(tap + 1) * CIN] = x_ref[
                ph, pw, pl.ds(row0 + roff, TILE_OH), pl.ds(coff, OW), :]

    # Single MXU contraction over all taps; accumulation stays in f32 on the MXU.
    lhs = slab_ref[...].reshape(TILE_OH * OW, K_PAD)
    acc = jnp.dot(lhs, w_ref[...], preferred_element_type=jnp.float32)
    if HAS_BIAS:
        acc = acc + b_ref[...].astype(jnp.float32)
    o_ref[...] = acc.astype(o_ref.dtype)


def _conv_direct_kernel(x_ref, w_ref, b_ref, o_ref, *,
                        KH, KW, SH, SW, TILE_OH, OW, CIN, HAS_BIAS):
    """Large-CIN / 1x1 path: no im2col — per-tap matmuls (K = CIN) accumulated in f32.

    w_ref : (KH*KW, CIN, COUT_PAD) per-tap weights.
    """
    t = pl.program_id(1)
    row0 = t * TILE_OH
    acc = None
    for kh in range(KH):
        ph, roff = kh % SH, kh // SH
        for kw in range(KW):
            pw, coff = kw % SW, kw // SW
            tap = kh * KW + kw
            lhs = x_ref[ph, pw, pl.ds(row0 + roff, TILE_OH), pl.ds(coff, OW), :]
            lhs = lhs.reshape(TILE_OH * OW, CIN)
            part = jnp.dot(lhs, w_ref[tap], preferred_element_type=jnp.float32)
            acc = part if acc is None else acc + part
    if HAS_BIAS:
        acc = acc + b_ref[...].astype(jnp.float32)
    o_ref[...] = acc.astype(o_ref.dtype)


class Conv2dStaticSamePadding:
    """JAX/Pallas port of the PyTorch module (deterministic synthetic parameters)."""

    def __init__(self, in_channels, out_channels, kernel_size, stride=1,
                 bias=True, groups=1, dilation=1, *, key, dtype=jnp.float32,
                 compute_dtype=None, tile_oh=None):
        if isinstance(kernel_size, int):
            kernel_size = [kernel_size] * 2
        elif len(kernel_size) == 1:
            kernel_size = [kernel_size[0]] * 2
        if isinstance(stride, int):
            stride = [stride] * 2
        elif len(stride) == 1:
            stride = [stride[0]] * 2

        assert groups == 1  # TODO(synk): grouped / depthwise conv not implemented.
        # NOTE: the PyTorch module does NOT forward `dilation` to nn.Conv2d, so the
        # effective dilation is always 1; mirrored here.
        self.in_channels = in_channels
        self.out_channels = out_channels
        self.kernel_size = list(kernel_size)
        self.stride = list(stride)
        self.has_bias = bias
        self.dtype = jnp.dtype(dtype)
        self.compute_dtype = jnp.dtype(compute_dtype if compute_dtype is not None
                                       else dtype)
        self.tile_oh = tile_oh
        self.cout_pad = _round_up(out_channels, 128)   # lane-dense output / MXU columns

        kh, kw = self.kernel_size
        fan_in = in_channels * kh * kw
        bound = 1.0 / math.sqrt(fan_in)
        wkey, bkey = jax.random.split(key)
        w_oihw = jax.random.uniform(wkey, (out_channels, in_channels, kh, kw),
                                    dtype=jnp.float32, minval=-bound, maxval=bound)
        w_hwio = jnp.transpose(w_oihw, (2, 3, 1, 0))
        # Round once through the MXU compute dtype so kernel and reference see the
        # exact same weights (only activation rounding differs under bf16).
        w_hwio = w_hwio.astype(self.compute_dtype).astype(jnp.float32)
        self.weight_hwio = w_hwio                       # f32 copy for the reference

        k_total = kh * kw * in_channels
        # Strategy switch (perf review): small CIN -> im2col slab + one matmul;
        # CIN >= 128 or 1x1 -> per-tap matmul accumulation (no im2col at all).
        self.use_slab = (kh * kw > 1) and (in_channels < 128)
        if self.use_slab:
            self.k_pad = _round_up(k_total, 128)
            w_fold = w_hwio.reshape(k_total, out_channels)
            w_fold = jnp.pad(w_fold, ((0, self.k_pad - k_total),
                                      (0, self.cout_pad - out_channels)))
            self.w_kernel = w_fold.astype(self.compute_dtype)
        else:
            self.k_pad = k_total
            w_taps = w_hwio.reshape(kh * kw, in_channels, out_channels)
            w_taps = jnp.pad(w_taps, ((0, 0), (0, 0),
                                      (0, self.cout_pad - out_channels)))
            self.w_kernel = w_taps.astype(self.compute_dtype)

        if bias:
            b = jax.random.uniform(bkey, (1, out_channels), dtype=jnp.float32,
                                   minval=-bound, maxval=bound)
        else:
            b = jnp.zeros((1, out_channels), jnp.float32)
        self.bias_f32 = b
        self.bias_padded = jnp.pad(b, ((0, 0), (0, self.cout_pad - out_channels)))

    def __call__(self, x):
        n, c, h, w = x.shape
        assert c == self.in_channels
        kh, kw = self.kernel_size
        sh, sw = self.stride
        cout_pad = self.cout_pad

        # SAME pad (incl. the negative-pad / crop case) fused with NCHW->NHWC.
        x_nhwc = _same_pad_nhwc(jnp.transpose(x, (0, 2, 3, 1)), kh, kw, sh, sw)
        hp, wp = x_nhwc.shape[1], x_nhwc.shape[2]
        oh = (hp - kh) // sh + 1
        ow = (wp - kw) // sw + 1

        # --- generation-aware VMEM budget & row-tile selection --------------------
        phys_vmem = _vmem_capacity_bytes()
        vmem_limit = int(min(0.70 * phys_vmem, 100 * 1024 * 1024))
        budget = int(0.80 * vmem_limit)

        cbytes = jnp.dtype(self.compute_dtype).itemsize
        obytes = jnp.dtype(x.dtype).itemsize
        wp_ph = ow + (kw - 1) // sw
        hp_ph_est = oh + (kh - 1) // sh + 8
        in_block = (sh * sw * hp_ph_est * _round_up(wp_ph, 16)
                    * _round_up(c, 128) * cbytes)         # VMEM-layout (lane-padded)
        w_bytes = int(self.w_kernel.size) * cbytes
        fixed = 2 * in_block + 2 * w_bytes + (1 << 20)     # double-buffered in + wts
        per_m = 2 * cout_pad * obytes                      # double-buffered out tile
        per_m += self.k_pad * cbytes if self.use_slab else cout_pad * 4

        if self.tile_oh is not None:
            tile_oh = min(self.tile_oh, oh)
            if tile_oh < oh:
                tile_oh = max(8, (tile_oh // 8) * 8)
        else:
            # M-cap 1024 rows is a middle ground: v5e saturates its 128-wide MXU near
            # 512, v6e could go to 2048, v7x prefers smaller tiles in 64 MiB VMEM.
            tile_oh = _choose_tile_oh(oh, ow, per_m, fixed, budget, m_cap=1024)

        n_ht = -(-oh // tile_oh)          # ragged row tiling: last tile may be partial
        oh_pad = n_ht * tile_oh

        # --- SAME-padded image -> stride-phase layout (every tap becomes a plain
        #     contiguous slice for any stride); extra zero rows/cols so the ragged
        #     last tile never reads out of bounds. -----------------------------------
        hp_ph = oh_pad + (kh - 1) // sh
        need_h, need_w = hp_ph * sh, wp_ph * sw
        x2 = x_nhwc[:, :min(hp, need_h), :min(wp, need_w), :]
        x2 = jnp.pad(x2, ((0, 0), (0, need_h - x2.shape[1]),
                          (0, need_w - x2.shape[2]), (0, 0)))
        x2 = x2.astype(self.compute_dtype)
        x_ph = x2.reshape(n, hp_ph, sh, wp_ph, sw, c).transpose(0, 2, 4, 1, 3, 5)
        # x_ph: (N, SH, SW, Hp_ph, Wp_ph, CIN)

        if self.use_slab:
            kernel = partial(_conv_slab_kernel, KH=kh, KW=kw, SH=sh, SW=sw,
                             TILE_OH=tile_oh, OW=ow, CIN=c, K=kh * kw * c,
                             K_PAD=self.k_pad, HAS_BIAS=self.has_bias)
            w_spec = pl.BlockSpec((self.k_pad, cout_pad), lambda b, t: (0, 0))
            scratch = [pltpu.VMEM((tile_oh, ow, self.k_pad), self.compute_dtype)]
        else:
            kernel = partial(_conv_direct_kernel, KH=kh, KW=kw, SH=sh, SW=sw,
                             TILE_OH=tile_oh, OW=ow, CIN=c, HAS_BIAS=self.has_bias)
            w_spec = pl.BlockSpec((kh * kw, c, cout_pad), lambda b, t: (0, 0, 0))
            scratch = []

        out_flat = pl.pallas_call(
            kernel,
            out_shape=jax.ShapeDtypeStruct((n, oh_pad * ow, cout_pad), x.dtype),
            grid_spec=pltpu.PrefetchScalarGridSpec(
                num_scalar_prefetch=0,
                grid=(n, n_ht),
                in_specs=[
                    # Whole (stride-phased) image per batch element: revisited across
                    # the row-tile axis, auto-pipelined/prefetched across the batch.
                    pl.BlockSpec((None, sh, sw, hp_ph, wp_ph, c),
                                 lambda b, t: (b, 0, 0, 0, 0, 0)),
                    w_spec,                                        # resident weights
                    pl.BlockSpec((1, cout_pad), lambda b, t: (0, 0)),   # bias
                ],
                out_specs=pl.BlockSpec((None, tile_oh * ow, cout_pad),
                                       lambda b, t: (b, t, 0)),
                scratch_shapes=scratch,
            ),
            compiler_params=pltpu.CompilerParams(
                # No cross-step state -> both axes parallel (dual-TC on v7x even at N=1).
                dimension_semantics=("parallel", "parallel"),
                vmem_limit_bytes=vmem_limit,
            ),
        )(x_ph, self.w_kernel, self.bias_padded)

        out = out_flat[:, :oh * ow, :self.out_channels].reshape(n, oh, ow,
                                                                self.out_channels)
        # TODO(synk): consumers that accept NHWC should skip this transpose (and keep
        # the COUT padding) to save a full extra HBM pass.
        return jnp.transpose(out, (0, 3, 1, 2))


def _reference(x, module):
    """Pure-JAX reference: identical SAME padding + lax.conv_general_dilated."""
    kh, kw = module.kernel_size
    sh, sw = module.stride
    xp = _same_pad_nhwc(jnp.transpose(x, (0, 2, 3, 1)), kh, kw, sh, sw)
    out = lax.conv_general_dilated(
        xp.astype(jnp.float32), module.weight_hwio, window_strides=(sh, sw),
        padding="VALID", dimension_numbers=("NHWC", "HWIO", "NHWC"),
        precision=lax.Precision.HIGHEST)
    if module.has_bias:
        out = out + module.bias_f32[0]
    return jnp.transpose(out, (0, 3, 1, 2))


if __name__ == "__main__":
    key = jax.random.PRNGKey(0)
    kp, kx = jax.random.split(key)

    def check(mod, x, atol, rtol, name):
        out = jax.block_until_ready(mod(x))
        ref = jax.block_until_ready(_reference(x, mod))
        assert out.shape == ref.shape, (name, out.shape, ref.shape)
        err = float(jnp.max(jnp.abs(out.astype(jnp.float32) - ref)))
        assert jnp.allclose(out.astype(jnp.float32), ref, atol=atol, rtol=rtol), (name, err)

    # 3x3 stride-1, tiny CIN -> im2col-slab path, single row tile (auto choice).
    x_a = jax.random.normal(kx, (2, 4, 16, 16), dtype=jnp.float32)
    mod_a = Conv2dStaticSamePadding(4, 8, kernel_size=3, stride=1, bias=True, key=kp)
    check(mod_a, x_a, 2e-4, 2e-4, "3x3_s1_slab")

    # Same conv, forced 8-row tiles on 20x20 -> multi-tile grid with a ragged last tile.
    x_b = jax.random.normal(kx, (1, 4, 20, 20), dtype=jnp.float32)
    mod_b = Conv2dStaticSamePadding(4, 8, kernel_size=3, stride=1, bias=True, key=kp,
                                    tile_oh=8)
    check(mod_b, x_b, 2e-4, 2e-4, "3x3_s1_ragged")

    # 3x3 stride-2 -> exercises the stride-phase layout (previously untested path).
    mod_c = Conv2dStaticSamePadding(4, 8, kernel_size=3, stride=2, bias=True, key=kp)
    check(mod_c, x_a, 2e-4, 2e-4, "3x3_s2")

    # 1x1 pointwise, CIN=128, no bias -> direct (no-im2col) path.
    x_d = jax.random.normal(kx, (2, 128, 8, 8), dtype=jnp.float32)
    mod_d = Conv2dStaticSamePadding(128, 32, kernel_size=1, stride=1, bias=False, key=kp)
    check(mod_d, x_d, 2e-4, 2e-4, "1x1_s1_direct")

    # bf16 MXU operands with f32 accumulation.
    mod_e = Conv2dStaticSamePadding(4, 8, kernel_size=3, stride=1, bias=True, key=kp,
                                    compute_dtype=jnp.bfloat16)
    check(mod_e, x_a, 3e-2, 3e-2, "3x3_s1_bf16")

    print("KERNEL_OK")
</pallas_src>

<mosaic_0001>
module attributes {stable_mosaic.version = 11 : i64} {
  func.func @_conv_slab_kernel(%arg0: i32, %arg1: i32, %arg2: memref<1x1x1x18x18x4xf32, #tpu.memory_space<vmem>>, %arg3: memref<128x128xf32, #tpu.memory_space<vmem>>, %arg4: memref<1x128xf32, #tpu.memory_space<vmem>>, %arg5: memref<1x256x128xf32, #tpu.memory_space<vmem>>, %arg6: memref<16x16x128xf32, #tpu.memory_space<vmem>>) attributes {dimension_semantics = [#tpu.dimension_semantics<parallel>, #tpu.dimension_semantics<parallel>], iteration_bounds = array<i64: 2, 1>, scalar_prefetch = 0 : i64, scratch_operands = 1 : i64, tpu.core_type = #tpu.core_type<tc>, window_params = [{transform_indices = @transform_0, window_bounds = array<i64: 1, 1, 1, 18, 18, 4>}, {pipeline_mode = #tpu.pipeline_mode<synchronous>, transform_indices = @transform_1, window_bounds = array<i64: 128, 128>}, {pipeline_mode = #tpu.pipeline_mode<synchronous>, transform_indices = @transform_2, window_bounds = array<i64: 1, 128>}, {transform_indices = @transform_3, window_bounds = array<i64: 1, 256, 128>}]} {
    %c16_i32 = arith.constant 16 : i32
    %0 = arith.muli %arg1, %c16_i32 : i32
    %cst = arith.constant 0.000000e+00 : f32
    %1 = vector.broadcast %cst : f32 to vector<16x16x92xf32>
    %c0 = arith.constant 0 : index
    %c0_0 = arith.constant 0 : index
    %c36 = arith.constant 36 : index
    %2 = vector.load %arg6[%c0, %c0_0, %c36] : memref<16x16x128xf32, #tpu.memory_space<vmem>>, vector<16x16x92xf32>
    tpu.vector_store %arg6[%c0, %c0_0, %c36], %1 {strides = array<i32>} : memref<16x16x128xf32, #tpu.memory_space<vmem>>, vector<16x16x92xf32>,
    %c0_i32 = arith.constant 0 : i32
    %3 = arith.addi %0, %c0_i32 : i32
    %c0_1 = arith.constant 0 : index
    %c0_2 = arith.constant 0 : index
    %c0_3 = arith.constant 0 : index
    %4 = arith.index_cast %3 : i32 to index
    %c0_4 = arith.constant 0 : index
    %c0_5 = arith.constant 0 : index
    %5 = vector.load %arg2[%c0_1, %c0_2, %c0_3, %4, %c0_4, %c0_5] : memref<1x1x1x18x18x4xf32, #tpu.memory_space<vmem>>, vector<1x1x1x16x16x4xf32>
    %6 = vector.shape_cast %5 : vector<1x1x1x16x16x4xf32> to vector<16x16x4xf32>
    %c0_6 = arith.constant 0 : index
    %c0_7 = arith.constant 0 : index
    %c0_8 = arith.constant 0 : index
    %7 = vector.load %arg6[%c0_6, %c0_7, %c0_8] : memref<16x16x128xf32, #tpu.memory_space<vmem>>, vector<16x16x4xf32>
    tpu.vector_store %arg6[%c0_6, %c0_7, %c0_8], %6 {strides = array<i32>} : memref<16x16x128xf32, #tpu.memory_space<vmem>>, vector<16x16x4xf32>,
    %c0_i32_9 = arith.constant 0 : i32
    %8 = arith.addi %0, %c0_i32_9 : i32
    %c0_10 = arith.constant 0 : index
    %c0_11 = arith.constant 0 : index
    %c0_12 = arith.constant 0 : index
    %9 = arith.index_cast %8 : i32 to index
    %c1 = arith.constant 1 : index
    %c0_13 = arith.constant 0 : index
    %10 = vector.load %arg2[%c0_10, %c0_11, %c0_12, %9, %c1, %c0_13] : memref<1x1x1x18x18x4xf32, #tpu.memory_space<vmem>>, vector<1x1x1x16x16x4xf32>
    %11 = vector.shape_cast %10 : vector<1x1x1x16x16x4xf32> to vector<16x16x4xf32>
    %c0_14 = arith.constant 0 : index
    %c0_15 = arith.constant 0 : index
    %c4 = arith.constant 4 : index
    %12 = vector.load %arg6[%c0_14, %c0_15, %c4] : memref<16x16x128xf32, #tpu.memory_space<vmem>>, vector<16x16x4xf32>
    tpu.vector_store %arg6[%c0_14, %c0_15, %c4], %11 {strides = array<i32>} : memref<16x16x128xf32, #tpu.memory_space<vmem>>, vector<16x16x4xf32>,
    %c0_i32_16 = arith.constant 0 : i32
    %13 = arith.addi %0, %c0_i32_16 : i32
    %c0_17 = arith.constant 0 : index
    %c0_18 = arith.constant 0 : index
    %c0_19 = arith.constant 0 : index
    %14 = arith.index_cast %13 : i32 to index
    %c2 = arith.constant 2 : index
    %c0_20 = arith.constant 0 : index
    %15 = vector.load %arg2[%c0_17, %c0_18, %c0_19, %14, %c2, %c0_20] : memref<1x1x1x18x18x4xf32, #tpu.memory_space<vmem>>, vector<1x1x1x16x16x4xf32>
    %16 = vector.shape_cast %15 : vector<1x1x1x16x16x4xf32> to vector<16x16x4xf32>
    %c0_21 = arith.constant 0 : index
    %c0_22 = arith.constant 0 : index
    %c8 = arith.constant 8 : index
    %17 = vector.load %arg6[%c0_21, %c0_22, %c8] : memref<16x16x128xf32, #tpu.memory_space<vmem>>, vector<16x16x4xf32>
    tpu.vector_store %arg6[%c0_21, %c0_22, %c8], %16 {strides = array<i32>} : memref<16x16x128xf32, #tpu.memory_space<vmem>>, vector<16x16x4xf32>,
    %c1_i32 = arith.constant 1 : i32
    %18 = arith.addi %0, %c1_i32 : i32
    %c0_23 = arith.constant 0 : index
    %c0_24 = arith.constant 0 : index
    %c0_25 = arith.constant 0 : index
    %19 = arith.index_cast %18 : i32 to index
    %c0_26 = arith.constant 0 : index
    %c0_27 = arith.constant 0 : index
    %20 = vector.load %arg2[%c0_23, %c0_24, %c0_25, %19, %c0_26, %c0_27] : memref<1x1x1x18x18x4xf32, #tpu.memory_space<vmem>>, vector<1x1x1x16x16x4xf32>
    %21 = vector.shape_cast %20 : vector<1x1x1x16x16x4xf32> to vector<16x16x4xf32>
    %c0_28 = arith.constant 0 : index
    %c0_29 = arith.constant 0 : index
    %c12 = arith.constant 12 : index
    %22 = vector.load %arg6[%c0_28, %c0_29, %c12] : memref<16x16x128xf32, #tpu.memory_space<vmem>>, vector<16x16x4xf32>
    tpu.vector_store %arg6[%c0_28, %c0_29, %c12], %21 {strides = array<i32>} : memref<16x16x128xf32, #tpu.memory_space<vmem>>, vector<16x16x4xf32>,
    %c1_i32_30 = arith.constant 1 : i32
    %23 = arith.addi %0, %c1_i32_30 : i32
    %c0_31 = arith.constant 0 : index
    %c0_32 = arith.constant 0 : index
    %c0_33 = arith.constant 0 : index
    %24 = arith.index_cast %23 : i32 to index
    %c1_34 = arith.constant 1 : index
    %c0_35 = arith.constant 0 : index
    %25 = vector.load %arg2[%c0_31, %c0_32, %c0_33, %24, %c1_34, %c0_35] : memref<1x1x1x18x18x4xf32, #tpu.memory_space<vmem>>, vector<1x1x1x16x16x4xf32>
    %26 = vector.shape_cast %25 : vector<1x1x1x16x16x4xf32> to vector<16x16x4xf32>
    %c0_36 = arith.constant 0 : index
    %c0_37 = arith.constant 0 : index
    %c16 = arith.constant 16 : index
    %27 = vector.load %arg6[%c0_36, %c0_37, %c16] : memref<16x16x128xf32, #tpu.memory_space<vmem>>, vector<16x16x4xf32>
    tpu.vector_store %arg6[%c0_36, %c0_37, %c16], %26 {strides = array<i32>} : memref<16x16x128xf32, #tpu.memory_space<vmem>>, vector<16x16x4xf32>,
    %c1_i32_38 = arith.constant 1 : i32
    %28 = arith.addi %0, %c1_i32_38 : i32
    %c0_39 = arith.constant 0 : index
    %c0_40 = arith.constant 0 : index
    %c0_41 = arith.constant 0 : index
    %29 = arith.index_cast %28 : i32 to index
    %c2_42 = arith.constant 2 : index
    %c0_43 = arith.constant 0 : index
    %30 = vector.load %arg2[%c0_39, %c0_40, %c0_41, %29, %c2_42, %c0_43] : memref<1x1x1x18x18x4xf32, #tpu.memory_space<vmem>>, vector<1x1x1x16x16x4xf32>
    %31 = vector.shape_cast %30 : vector<1x1x1x16x16x4xf32> to vector<16x16x4xf32>
    %c0_44 = arith.constant 0 : index
    %c0_45 = arith.constant 0 : index
    %c20 = arith.constant 20 : index
    %32 = vector.load %arg6[%c0_44, %c0_45, %c20] : memref<16x16x128xf32, #tpu.memory_space<vmem>>, vector<16x16x4xf32>
    tpu.vector_store %arg6[%c0_44, %c0_45, %c20], %31 {strides = array<i32>} : memref<16x16x128xf32, #tpu.memory_space<vmem>>, vector<16x16x4xf32>,
    %c2_i32 = arith.constant 2 : i32
    %33 = arith.addi %0, %c2_i32 : i32
    %c0_46 = arith.constant 0 : index
    %c0_47 = arith.constant 0 : index
    %c0_48 = arith.constant 0 : index
    %34 = arith.index_cast %33 : i32 to index
    %c0_49 = arith.constant 0 : index
    %c0_50 = arith.constant 0 : index
    %35 = vector.load %arg2[%c0_46, %c0_47, %c0_48, %34, %c0_49, %c0_50] : memref<1x1x1x18x18x4xf32, #tpu.memory_space<vmem>>, vector<1x1x1x16x16x4xf32>
    %36 = vector.shape_cast %35 : vector<1x1x1x16x16x4xf32> to vector<16x16x4xf32>
    %c0_51 = arith.constant 0 : index
    %c0_52 = arith.constant 0 : index
    %c24 = arith.constant 24 : index
    %37 = vector.load %arg6[%c0_51, %c0_52, %c24] : memref<16x16x128xf32, #tpu.memory_space<vmem>>, vector<16x16x4xf32>
    tpu.vector_store %arg6[%c0_51, %c0_52, %c24], %36 {strides = array<i32>} : memref<16x16x128xf32, #tpu.memory_space<vmem>>, vector<16x16x4xf32>,
    %c2_i32_53 = arith.constant 2 : i32
    %38 = arith.addi %0, %c2_i32_53 : i32
    %c0_54 = arith.constant 0 : index
    %c0_55 = arith.constant 0 : index
    %c0_56 = arith.constant 0 : index
    %39 = arith.index_cast %38 : i32 to index
    %c1_57 = arith.constant 1 : index
    %c0_58 = arith.constant 0 : index
    %40 = vector.load %arg2[%c0_54, %c0_55, %c0_56, %39, %c1_57, %c0_58] : memref<1x1x1x18x18x4xf32, #tpu.memory_space<vmem>>, vector<1x1x1x16x16x4xf32>
    %41 = vector.shape_cast %40 : vector<1x1x1x16x16x4xf32> to vector<16x16x4xf32>
    %c0_59 = arith.constant 0 : index
    %c0_60 = arith.constant 0 : index
    %c28 = arith.constant 28 : index
    %42 = vector.load %arg6[%c0_59, %c0_60, %c28] : memref<16x16x128xf32, #tpu.memory_space<vmem>>, vector<16x16x4xf32>
    tpu.vector_store %arg6[%c0_59, %c0_60, %c28], %41 {strides = array<i32>} : memref<16x16x128xf32, #tpu.memory_space<vmem>>, vector<16x16x4xf32>,
    %c2_i32_61 = arith.constant 2 : i32
    %43 = arith.addi %0, %c2_i32_61 : i32
    %c0_62 = arith.constant 0 : index
    %c0_63 = arith.constant 0 : index
    %c0_64 = arith.constant 0 : index
    %44 = arith.index_cast %43 : i32 to index
    %c2_65 = arith.constant 2 : index
    %c0_66 = arith.constant 0 : index
    %45 = vector.load %arg2[%c0_62, %c0_63, %c0_64, %44, %c2_65, %c0_66] : memref<1x1x1x18x18x4xf32, #tpu.memory_space<vmem>>, vector<1x1x1x16x16x4xf32>
    %46 = vector.shape_cast %45 : vector<1x1x1x16x16x4xf32> to vector<16x16x4xf32>
    %c0_67 = arith.constant 0 : index
    %c0_68 = arith.constant 0 : index
    %c32 = arith.constant 32 : index
    %47 = vector.load %arg6[%c0_67, %c0_68, %c32] : memref<16x16x128xf32, #tpu.memory_space<vmem>>, vector<16x16x4xf32>
    tpu.vector_store %arg6[%c0_67, %c0_68, %c32], %46 {strides = array<i32>} : memref<16x16x128xf32, #tpu.memory_space<vmem>>, vector<16x16x4xf32>,
    %c0_69 = arith.constant 0 : index
    %c0_70 = arith.constant 0 : index
    %c0_71 = arith.constant 0 : index
    %48 = vector.load %arg6[%c0_69, %c0_70, %c0_71] : memref<16x16x128xf32, #tpu.memory_space<vmem>>, vector<16x16x128xf32>
    %49 = vector.shape_cast %48 : vector<16x16x128xf32> to vector<256x128xf32>
    %c0_72 = arith.constant 0 : index
    %c0_73 = arith.constant 0 : index
    %50 = vector.load %arg3[%c0_72, %c0_73] : memref<128x128xf32, #tpu.memory_space<vmem>>, vector<128x128xf32>
    %cst_74 = arith.constant dense<0.000000e+00> : vector<256x128xf32>
    %51 = tpu.matmul %49, %50, %cst_74 {dimension_numbers = #tpu.dot_dimension_numbers<[1], [0], [0], [1], [0, 0, 1, 1], [], []>} : vector<256x128xf32>, vector<128x128xf32>, vector<256x128xf32> -> vector<256x128xf32>
    %c0_75 = arith.constant 0 : index
    %c0_76 = arith.constant 0 : index
    %52 = vector.load %arg4[%c0_75, %c0_76] : memref<1x128xf32, #tpu.memory_space<vmem>>, vector<1x128xf32>
    %53 = vector.broadcast %52 : vector<1x128xf32> to vector<256x128xf32>
    %54 = arith.addf %51, %53 : vector<256x128xf32>
    %c0_77 = arith.constant 0 : index
    %c0_78 = arith.constant 0 : index
    %c0_79 = arith.constant 0 : index
    %55 = vector.load %arg5[%c0_77, %c0_78, %c0_79] : memref<1x256x128xf32, #tpu.memory_space<vmem>>, vector<1x256x128xf32>
    %56 = vector.shape_cast %55 : vector<1x256x128xf32> to vector<256x128xf32>
    %57 = vector.shape_cast %54 : vector<256x128xf32> to vector<1x256x128xf32>
    tpu.vector_store %arg5[%c0_77, %c0_78, %c0_79], %57 {strides = array<i32>} : memref<1x256x128xf32, #tpu.memory_space<vmem>>, vector<1x256x128xf32>,
    return
  }
  func.func @transform_0(%arg0: i32, %arg1: i32) -> (i32, i32, i32, i32, i32, i32) {
    %c0_i32 = arith.constant 0 : i32
    %c0_i32_0 = arith.constant 0 : i32
    %c0_i32_1 = arith.constant 0 : i32
    %c0_i32_2 = arith.constant 0 : i32
    %c0_i32_3 = arith.constant 0 : i32
    %c0_i32_4 = arith.constant 0 : i32
    return %arg0, %c0_i32, %c0_i32_0, %c0_i32_1, %c0_i32_2, %c0_i32_3 : i32, i32, i32, i32, i32, i32
  }
  func.func @transform_1(%arg0: i32, %arg1: i32) -> (i32, i32) {
    %c0_i32 = arith.constant 0 : i32
    %c0_i32_0 = arith.constant 0 : i32
    %c0_i32_1 = arith.constant 0 : i32
    return %c0_i32, %c0_i32_0 : i32, i32
  }
  func.func @transform_2(%arg0: i32, %arg1: i32) -> (i32, i32) {
    %c0_i32 = arith.constant 0 : i32
    %c0_i32_0 = arith.constant 0 : i32
    %c0_i32_1 = arith.constant 0 : i32
    return %c0_i32, %c0_i32_0 : i32, i32
  }
  func.func @transform_3(%arg0: i32, %arg1: i32) -> (i32, i32, i32) {
    %c0_i32 = arith.constant 0 : i32
    %c0_i32_0 = arith.constant 0 : i32
    return %arg0, %arg1, %c0_i32 : i32, i32, i32
  }
}

</mosaic_0001>

<llo_original>
// kernel: tpu_custom_call.1
$region0: #{tpu_custom_call.1}
  #allocation0 [shape = 'u32[]', space=smem, size = 0x4, offset = 0x4, fixed_abs, tag = 'smem constant byte address 0x4 - core index']
  #allocation1 [shape = 'u32[72,128]{1,0:T(1,128)}', space=vmem, size = 0x9000, scoped, tag = 'internal scratch']
  #allocation2 [shape = 'f32[16,16,128]{2,1,0:T(8,128)}', space=vmem, size = 0x20000, scoped, tag = 'scratch operand']
  %s0 = inlined_call_operand.vmem [shape: f32[2,1,1,18,18,4], index: 0, kind: input, shape index: {}]
  %s1 = inlined_call_operand.vmem [shape: f32[128,128], index: 1, kind: input, shape index: {}]
  %s2 = inlined_call_operand.vmem [shape: f32[1,128], index: 2, kind: input, shape index: {}]
  %s3 = inlined_call_operand.hbm [shape: f32[2,256,128], index: 3, kind: output, shape index: {}]
  %s4 = sld [smem:[#allocation0]]
  $region45: #{tpu_custom_call.1} parent=0
    _
  %s6 = ssub.s32 1, %s4
  %s7 = scalar_select 0, %s6, %s4
  $region1: #{tpu_custom_call.1} parent=0
    #allocation3 [shape = 'u8[262144]{0}', space=vmem, size = 0x40000, scoped, tag = 'output window, operand 0']
    #allocation4 [shape = 's32[2]{0}', space=sflag, size = 0x8, scoped, tag = 'scoped memory for tpu_custom_call.1']
    %8 = vsyncpa [#allocation4], 0
    %s9 = scalar_lea.sflag [#allocation4], 1
    %10 = vsyncpa %s9, 0
    loop: start=0, step=1, limit=4
    $region2: #{tpu_custom_call.1} parent=1 // loop_pre_header
      _
    $region3: #{tpu_custom_call.1} parent=1 // loop_header
      %s12 = sphi 0, %s16
      %p13 = scmp.ge.s32.totalorder %s12, 4
      %s19 = sphi 0, %s31
      %s20 = sphi 0, %s27
      %s21 = sphi 0, %s19
      %s22 = sphi 0, %s20
      %s23 = sphi 0, %s21
      %s24 = sphi 0, %s22
      %s34 = sphi 0, %s36
      %s37 = sphi 0, %s34
      %s38 = sphi 0, %s37
      %s54 = sphi 0, %s38
      %s58 = sphi 0, %s58
      %s60 = sphi 0, %s58
      %s61 = sphi 0, %s60
      %s75 = sphi 0, %s61
      %s79 = sphi 0, %s79
      %s81 = sphi 0, %s79
      %s82 = sphi 0, %s81
      %s96 = sphi 0, %s82
      %s104 = sphi 0, %s106
      %s107 = sphi 0, %s104
      %s108 = sphi 0, %s107
      %s124 = sphi 0, %s108
    $region4: #{tpu_custom_call.1} parent=1 // loop_header_branch
      %15 = sbr.rel (%p13) target = $region8
    $region5: #{tpu_custom_call.1} parent=1 // loop_body
      %s17 = ssub.s32 %s12, 1
      %s18 = ssub.s32 %s12, 2
      %s25 = sadd.s32 1, %s20
      %p26 = scmp.ge.s32.totalorder %s25, 1
      %s27 = scalar_select %p26, 0, %s25
      %s28 = sadd.s32 1, %s19
      %s29 = scalar_select %p26, %s28, %s19
      %p30 = scmp.ge.s32.totalorder %s29, 2
      %s31 = scalar_select %p30, 0, %s29
      %s32 = ssub.s32 %s19, %s31
      %p33 = scmp.eq.s32.totalorder %s32, 0
      %s35 = sadd.s32 %s34, 1
      %s36 = scalar_select %p33, %s34, %s35
      %p39 = pneg %p33
      %p40 = scmp.eq.s32.totalorder %s12, 1
      %p41 = por %p39, %p40
      %p42 = scmp.ne.s32.totalorder %s34, %s37
      %p43 = scmp.eq.s32.totalorder %s12, 0
      %p44 = por %p42, %p43
      %p45 = scmp.ne.s32.totalorder %s34, %s37
      %p46 = scmp.eq.s32.totalorder %s17, 1
      %p47 = por %p45, %p46
      %p48 = scmp.ne.s32.totalorder %s37, %s38
      %p49 = scmp.eq.s32.totalorder %s17, 0
      %p50 = por %p48, %p49
      %p51 = scmp.ne.s32.totalorder %s37, %s38
      %p52 = scmp.eq.s32.totalorder %s18, 1
      %p53 = por %p51, %p52
      %p55 = scmp.ne.s32.totalorder %s38, %s54
      %p56 = scmp.eq.s32.totalorder %s18, 0
      %p57 = por %p55, %p56
      %s59 = sadd.s32 %s58, 1
      %p62 = scmp.eq.s32.totalorder %s12, 1
      %p63 = scmp.ne.s32.totalorder %s58, %s60
      %p64 = scmp.eq.s32.totalorder %s12, 0
      %p65 = por %p63, %p64
      %p66 = scmp.ne.s32.totalorder %s58, %s60
      %p67 = scmp.eq.s32.totalorder %s17, 1
      %p68 = por %p66, %p67
      %p69 = scmp.ne.s32.totalorder %s60, %s61
      %p70 = scmp.eq.s32.totalorder %s17, 0
      %p71 = por %p69, %p70
      %p72 = scmp.ne.s32.totalorder %s60, %s61
      %p73 = scmp.eq.s32.totalorder %s18, 1
      %p74 = por %p72, %p73
      %p76 = scmp.ne.s32.totalorder %s61, %s75
      %p77 = scmp.eq.s32.totalorder %s18, 0
      %p78 = por %p76, %p77
      %s80 = sadd.s32 %s79, 1
      %p83 = scmp.eq.s32.totalorder %s12, 1
      %p84 = scmp.ne.s32.totalorder %s79, %s81
      %p85 = scmp.eq.s32.totalorder %s12, 0
      %p86 = por %p84, %p85
      %p87 = scmp.ne.s32.totalorder %s79, %s81
      %p88 = scmp.eq.s32.totalorder %s17, 1
      %p89 = por %p87, %p88
      %p90 = scmp.ne.s32.totalorder %s81, %s82
      %p91 = scmp.eq.s32.totalorder %s17, 0
      %p92 = por %p90, %p91
      %p93 = scmp.ne.s32.totalorder %s81, %s82
      %p94 = scmp.eq.s32.totalorder %s18, 1
      %p95 = por %p93, %p94
      %p97 = scmp.ne.s32.totalorder %s82, %s96
      %p98 = scmp.eq.s32.totalorder %s18, 0
      %p99 = por %p97, %p98
      %s100 = ssub.s32 %s19, %s31
      %s101 = ssub.s32 %s20, %s27
      %s102 = sor.u32 %s100, %s101
      %p103 = scmp.eq.s32.totalorder %s102, 0
      %s105 = sadd.s32 %s104, 1
      %s106 = scalar_select %p103, %s104, %s105
      %p109 = pneg %p103
      %p110 = scmp.eq.s32.totalorder %s12, 1
      %p111 = por %p109, %p110
      %p112 = scmp.ne.s32.totalorder %s104, %s107
      %p113 = scmp.eq.s32.totalorder %s12, 0
      %p114 = por %p112, %p113
      %p115 = scmp.ne.s32.totalorder %s104, %s107
      %p116 = scmp.eq.s32.totalorder %s17, 1
      %p117 = por %p115, %p116
      %p118 = scmp.ne.s32.totalorder %s107, %s108
      %p119 = scmp.eq.s32.totalorder %s17, 0
      %p120 = por %p118, %p119
      %p121 = scmp.ne.s32.totalorder %s107, %s108
      %p122 = scmp.eq.s32.totalorder %s18, 1
      %p123 = por %p121, %p122
      %p125 = scmp.ne.s32.totalorder %s108, %s124
      %p126 = scmp.eq.s32.totalorder %s18, 0
      %p127 = por %p125, %p126
      %p128 = scmp.le.s32.totalorder 1, %s12
      %p129 = scmp.lt.s32.totalorder %s12, 3
      %p130 = pnand %p128, %p129
      %p131 = pneg %p130
      // Predicated region
      $region9: #{tpu_custom_call.1} parent=5 // pred_check
        _
      $region10: #{tpu_custom_call.1} parent=5 // pred_check_branch
        %133 = sbr.rel (%p130) target = $region12
      $region11: #{tpu_custom_call.1} parent=5 // pred_region
        %s134 = ssub.s32 %s12, 1
        // Predicated region
        $region13: #{tpu_custom_call.1} parent=11 // pred_check
          %p135 = pneg %p71
        $region14: #{tpu_custom_call.1} parent=11 // pred_check_branch
          %137 = sbr.rel (%p135) target = $region16
        $region15: #{tpu_custom_call.1} parent=11 // pred_region
          _
        $region16: #{tpu_custom_call.1} parent=11 // pred_fallthru
          _
        // Predicated region
        $region17: #{tpu_custom_call.1} parent=11 // pred_check
          %p138 = pneg %p92
        $region18: #{tpu_custom_call.1} parent=11 // pred_check_branch
          %140 = sbr.rel (%p138) target = $region20
        $region19: #{tpu_custom_call.1} parent=11 // pred_region
          _
        $region20: #{tpu_custom_call.1} parent=11 // pred_fallthru
          _
      $region12: #{tpu_custom_call.1} parent=5 // pred_fallthru
        _
      %p141 = scmp.lt.s32.totalorder %s12, 2
      // Predicated region
      $region21: #{tpu_custom_call.1} parent=5 // pred_check
        %p142 = pneg %p141
      $region22: #{tpu_custom_call.1} parent=5 // pred_check_branch
        %144 = sbr.rel (%p142) target = $region24
      $region23: #{tpu_custom_call.1} parent=5 // pred_region
        // Predicated region
        $region25: #{tpu_custom_call.1} parent=23 // pred_check
          %p145 = pneg %p44
        $region26: #{tpu_custom_call.1} parent=23 // pred_check_branch
          %147 = sbr.rel (%p145) target = $region28
        $region27: #{tpu_custom_call.1} parent=23 // pred_region
          %p148 = scmp.lt.s32.totalorder %s19, 1
          %s149 = scalar_select %p148, %s19, 1
          %s150 = smul.addr %s149, 54
          %s151 = smul.addr %s150, 8
          %s152 = scalar_lea.vmem %s0, %s151
        $region28: #{tpu_custom_call.1} parent=23 // pred_fallthru
          _
      $region24: #{tpu_custom_call.1} parent=5 // pred_fallthru
        _
      %p153 = scmp.le.s32.totalorder 1, %s12
      %p154 = scmp.lt.s32.totalorder %s12, 3
      %p155 = pnand %p153, %p154
      %p156 = pneg %p155
      // Predicated region
      $region29: #{tpu_custom_call.1} parent=5 // pred_check
        _
      $region30: #{tpu_custom_call.1} parent=5 // pred_check_branch
        %158 = sbr.rel (%p155) target = $region32
      $region31: #{tpu_custom_call.1} parent=5 // pred_region
        %s159 = ssub.s32 %s12, 1
        %p160 = scmp.lt.s32.totalorder %s21, 1
        %s161 = scalar_select %p160, %s21, 1
        %s162 = smul.addr %s161, 54
        %s163 = smul.addr %s162, 8
        %s164 = scalar_lea.vmem %s0, %s163
        %p165 = pneg %p50
        %p166 = pneg %p47
        %p167 = pneg %p71
        %p168 = pneg %p68
        %p169 = pneg %p92
        %p170 = pneg %p89
        %p171 = pneg %p120
        %p172 = pneg %p117
        %s173 = sand.u32 %s107, 1
        %s174 = scalar_lea.sflag [#allocation4], %s173
        %s175 = sand.u32 %s107, 1
        %s176 = smul.addr %s175, 256
        %s177 = scalar_lea.vmem [#allocation3], %s176
        %p178 = scmp.lt.s32.totalorder %s21, 1
        %s179 = scalar_select %p178, %s21, 1
        %s180 = smul.addr %s179, 54
        %s181 = smul.addr %s180, 8
        %s182 = scalar_lea.vmem %s0, %s181
        %s183 = smul.u32 32, %s22
        %s184 = smul.u32 %s22, 16
        %vm185 = vcmask 1047840
        %186 = vst.msk [vmem:[#allocation2] sm:$0xff] %vm185, 0.0
        %187 = vst.msk [vmem:[#allocation2 + $0x8] sm:$0xff] %vm185, 0.0
        %188 = vst.msk [vmem:[#allocation2 + $0x10] sm:$0xff] %vm185, 0.0
        %189 = vst.msk [vmem:[#allocation2 + $0x18] sm:$0xff] %vm185, 0.0
        %190 = vst.msk [vmem:[#allocation2 + $0x20] sm:$0xff] %vm185, 0.0
        %191 = vst.msk [vmem:[#allocation2 + $0x28] sm:$0xff] %vm185, 0.0
        %192 = vst.msk [vmem:[#allocation2 + $0x30] sm:$0xff] %vm185, 0.0
        %193 = vst.msk [vmem:[#allocation2 + $0x38] sm:$0xff] %vm185, 0.0
        %194 = vst.msk [vmem:[#allocation2 + $0x40] sm:$0xff] %vm185, 0.0
        %195 = vst.msk [vmem:[#allocation2 + $0x48] sm:$0xff] %vm185, 0.0
        %196 = vst.msk [vmem:[#allocation2 + $0x50] sm:$0xff] %vm185, 0.0
        %197 = vst.msk [vmem:[#allocation2 + $0x58] sm:$0xff] %vm185, 0.0
        %198 = vst.msk [vmem:[#allocation2 + $0x60] sm:$0xff] %vm185, 0.0
        %199 = vst.msk [vmem:[#allocation2 + $0x68] sm:$0xff] %vm185, 0.0
        %200 = vst.msk [vmem:[#allocation2 + $0x70] sm:$0xff] %vm185, 0.0
        %201 = vst.msk [vmem:[#allocation2 + $0x78] sm:$0xff] %vm185, 0.0
        %202 = vst.msk [vmem:[#allocation2 + $0x80] sm:$0xff] %vm185, 0.0
        %203 = vst.msk [vmem:[#allocation2 + $0x88] sm:$0xff] %vm185, 0.0
        %204 = vst.msk [vmem:[#allocation2 + $0x90] sm:$0xff] %vm185, 0.0
        %205 = vst.msk [vmem:[#allocation2 + $0x98] sm:$0xff] %vm185, 0.0
        %206 = vst.msk [vmem:[#allocation2 + $0xa0] sm:$0xff] %vm185, 0.0
        %207 = vst.msk [vmem:[#allocation2 + $0xa8] sm:$0xff] %vm185, 0.0
        %208 = vst.msk [vmem:[#allocation2 + $0xb0] sm:$0xff] %vm185, 0.0
        %209 = vst.msk [vmem:[#allocation2 + $0xb8] sm:$0xff] %vm185, 0.0
        %210 = vst.msk [vmem:[#allocation2 + $0xc0] sm:$0xff] %vm185, 0.0
        %211 = vst.msk [vmem:[#allocation2 + $0xc8] sm:$0xff] %vm185, 0.0
        %212 = vst.msk [vmem:[#allocation2 + $0xd0] sm:$0xff] %vm185, 0.0
        %213 = vst.msk [vmem:[#allocation2 + $0xd8] sm:$0xff] %vm185, 0.0
        %214 = vst.msk [vmem:[#allocation2 + $0xe0] sm:$0xff] %vm185, 0.0
        %215 = vst.msk [vmem:[#allocation2 + $0xe8] sm:$0xff] %vm185, 0.0
        %216 = vst.msk [vmem:[#allocation2 + $0xf0] sm:$0xff] %vm185, 0.0
        %217 = vst.msk [vmem:[#allocation2 + $0xf8] sm:$0xff] %vm185, 0.0
        %s218 = smul.u32 %s184, 24
        %s219 = scalar_lea.vmem %s182, %s218
        %v220 = vld [vmem:[%s219] sm:$0xff]
        %v221 = vld [vmem:[%s219 + $0x8] sm:$0xff]
        %v222 = vld [vmem:[%s219 + $0x18] sm:$0xff]
        %v223 = vld [vmem:[%s219 + $0x20] sm:$0xff]
        %v224 = vld [vmem:[%s219 + $0x30] sm:$0xff]
        %v225 = vld [vmem:[%s219 + $0x38] sm:$0xff]
        %v226 = vld [vmem:[%s219 + $0x48] sm:$0xff]
        %v227 = vld [vmem:[%s219 + $0x50] sm:$0xff]
        %v228 = vld [vmem:[%s219 + $0x60] sm:$0xff]
        %v229 = vld [vmem:[%s219 + $0x68] sm:$0xff]
        %v230 = vld [vmem:[%s219 + $0x78] sm:$0xff]
        %v231 = vld [vmem:[%s219 + $0x80] sm:$0xff]
        %v232 = vld [vmem:[%s219 + $0x90] sm:$0xff]
        %v233 = vld [vmem:[%s219 + $0x98] sm:$0xff]
        %v234 = vld [vmem:[%s219 + $0xa8] sm:$0xff]
        %v235 = vld [vmem:[%s219 + $0xb0] sm:$0xff]
        %v236 = vld [vmem:[%s219 + $0xc0] sm:$0xff]
        %v237 = vld [vmem:[%s219 + $0xc8] sm:$0xff]
        %v238 = vld [vmem:[%s219 + $0xd8] sm:$0xff]
        %v239 = vld [vmem:[%s219 + $0xe0] sm:$0xff]
        %v240 = vld [vmem:[%s219 + $0xf0] sm:$0xff]
        %v241 = vld [vmem:[%s219 + $0xf8] sm:$0xff]
        %v242 = vld [vmem:[%s219 + $0x108] sm:$0xff]
        %v243 = vld [vmem:[%s219 + $0x110] sm:$0xff]
        %v244 = vld [vmem:[%s219 + $0x120] sm:$0xff]
        %v245 = vld [vmem:[%s219 + $0x128] sm:$0xff]
        %v246 = vld [vmem:[%s219 + $0x138] sm:$0xff]
        %v247 = vld [vmem:[%s219 + $0x140] sm:$0xff]
        %v248 = vld [vmem:[%s219 + $0x150] sm:$0xff]
        %v249 = vld [vmem:[%s219 + $0x158] sm:$0xff]
        %v250 = vld [vmem:[%s219 + $0x168] sm:$0xff]
        %v251 = vld [vmem:[%s219 + $0x170] sm:$0xff]
        %vm252 = vcmask 31744
        %253 = vst.msk [vmem:[#allocation2] sm:$0xff] %vm252, %v220
        %254 = vst.msk [vmem:[#allocation2 + $0x8] sm:$0xff] %vm252, %v221
        %255 = vst.msk [vmem:[#allocation2 + $0x10] sm:$0xff] %vm252, %v222
        %256 = vst.msk [vmem:[#allocation2 + $0x18] sm:$0xff] %vm252, %v223
        %257 = vst.msk [vmem:[#allocation2 + $0x20] sm:$0xff] %vm252, %v224
        %258 = vst.msk [vmem:[#allocation2 + $0x28] sm:$0xff] %vm252, %v225
        %259 = vst.msk [vmem:[#allocation2 + $0x30] sm:$0xff] %vm252, %v226
        %260 = vst.msk [vmem:[#allocation2 + $0x38] sm:$0xff] %vm252, %v227
        %261 = vst.msk [vmem:[#allocation2 + $0x40] sm:$0xff] %vm252, %v228
        %262 = vst.msk [vmem:[#allocation2 + $0x48] sm:$0xff] %vm252, %v229
        %263 = vst.msk [vmem:[#allocation2 + $0x50] sm:$0xff] %vm252, %v230
        %264 = vst.msk [vmem:[#allocation2 + $0x58] sm:$0xff] %vm252, %v231
        %265 = vst.msk [vmem:[#allocation2 + $0x60] sm:$0xff] %vm252, %v232
        %266 = vst.msk [vmem:[#allocation2 + $0x68] sm:$0xff] %vm252, %v233
        %267 = vst.msk [vmem:[#allocation2 + $0x70] sm:$0xff] %vm252, %v234
        %268 = vst.msk [vmem:[#allocation2 + $0x78] sm:$0xff] %vm252, %v235
        %269 = vst.msk [vmem:[#allocation2 + $0x80] sm:$0xff] %vm252, %v236
        %270 = vst.msk [vmem:[#allocation2 + $0x88] sm:$0xff] %vm252, %v237
        %271 = vst.msk [vmem:[#allocation2 + $0x90] sm:$0xff] %vm252, %v238
        %272 = vst.msk [vmem:[#allocation2 + $0x98] sm:$0xff] %vm252, %v239
        %273 = vst.msk [vmem:[#allocation2 + $0xa0] sm:$0xff] %vm252, %v240
        %274 = vst.msk [vmem:[#allocation2 + $0xa8] sm:$0xff] %vm252, %v241
        %275 = vst.msk [vmem:[#allocation2 + $0xb0] sm:$0xff] %vm252, %v242
        %276 = vst.msk [vmem:[#allocation2 + $0xb8] sm:$0xff] %vm252, %v243
        %277 = vst.msk [vmem:[#allocation2 + $0xc0] sm:$0xff] %vm252, %v244
        %278 = vst.msk [vmem:[#allocation2 + $0xc8] sm:$0xff] %vm252, %v245
        %279 = vst.msk [vmem:[#allocation2 + $0xd0] sm:$0xff] %vm252, %v246
        %280 = vst.msk [vmem:[#allocation2 + $0xd8] sm:$0xff] %vm252, %v247
        %281 = vst.msk [vmem:[#allocation2 + $0xe0] sm:$0xff] %vm252, %v248
        %282 = vst.msk [vmem:[#allocation2 + $0xe8] sm:$0xff] %vm252, %v249
        %283 = vst.msk [vmem:[#allocation2 + $0xf0] sm:$0xff] %vm252, %v250
        %284 = vst.msk [vmem:[#allocation2 + $0xf8] sm:$0xff] %vm252, %v251
        %v285 = vld [vmem:[%s219 + $0x1] sm:$0xff]
        %v286 = vld [vmem:[%s219 + $0x9] sm:$0xff]
        %v287 = vld [vmem:[%s219 + $0x19] sm:$0xff]
        %v288 = vld [vmem:[%s219 + $0x21] sm:$0xff]
        %v289 = vld [vmem:[%s219 + $0x31] sm:$0xff]
        %v290 = vld [vmem:[%s219 + $0x39] sm:$0xff]
        %v291 = vld [vmem:[%s219 + $0x49] sm:$0xff]
        %v292 = vld [vmem:[%s219 + $0x51] sm:$0xff]
        %v293 = vld [vmem:[%s219 + $0x61] sm:$0xff]
        %v294 = vld [vmem:[%s219 + $0x69] sm:$0xff]
        %v295 = vld [vmem:[%s219 + $0x79] sm:$0xff]
        %v296 = vld [vmem:[%s219 + $0x81] sm:$0xff]
        %v297 = vld [vmem:[%s219 + $0x91] sm:$0xff]
        %v298 = vld [vmem:[%s219 + $0x99] sm:$0xff]
        %v299 = vld [vmem:[%s219 + $0xa9] sm:$0xff]
        %v300 = vld [vmem:[%s219 + $0xb1] sm:$0xff]
        %v301 = vld [vmem:[%s219 + $0xc1] sm:$0xff]
        %v302 = vld [vmem:[%s219 + $0xc9] sm:$0xff]
        %v303 = vld [vmem:[%s219 + $0xd9] sm:$0xff]
        %v304 = vld [vmem:[%s219 + $0xe1] sm:$0xff]
        %v305 = vld [vmem:[%s219 + $0xf1] sm:$0xff]
        %v306 = vld [vmem:[%s219 + $0xf9] sm:$0xff]
        %v307 = vld [vmem:[%s219 + $0x109] sm:$0xff]
        %v308 = vld [vmem:[%s219 + $0x111] sm:$0xff]
        %v309 = vld [vmem:[%s219 + $0x121] sm:$0xff]
        %v310 = vld [vmem:[%s219 + $0x129] sm:$0xff]
        %v311 = vld [vmem:[%s219 + $0x139] sm:$0xff]
        %v312 = vld [vmem:[%s219 + $0x141] sm:$0xff]
        %v313 = vld [vmem:[%s219 + $0x151] sm:$0xff]
        %v314 = vld [vmem:[%s219 + $0x159] sm:$0xff]
        %v315 = vld [vmem:[%s219 + $0x169] sm:$0xff]
        %v316 = vld [vmem:[%s219 + $0x171] sm:$0xff]
        %349 = vrot.lane.b32.xlu0 %v285, 4
        %v350 = vpop.permute.xlu0 %349
        %351 = vrot.lane.b32.xlu0 %v286, 4
        %v352 = vpop.permute.xlu0 %351
        %353 = vrot.lane.b32.xlu0 %v287, 4
        %v354 = vpop.permute.xlu0 %353
        %355 = vrot.lane.b32.xlu0 %v288, 4
        %v356 = vpop.permute.xlu0 %355
        %357 = vrot.lane.b32.xlu0 %v289, 4
        %v358 = vpop.permute.xlu0 %357
        %359 = vrot.lane.b32.xlu0 %v290, 4
        %v360 = vpop.permute.xlu0 %359
        %361 = vrot.lane.b32.xlu0 %v291, 4
        %v362 = vpop.permute.xlu0 %361
        %363 = vrot.lane.b32.xlu0 %v292, 4
        %v364 = vpop.permute.xlu0 %363
        %365 = vrot.lane.b32.xlu0 %v293, 4
        %v366 = vpop.permute.xlu0 %365
        %367 = vrot.lane.b32.xlu0 %v294, 4
        %v368 = vpop.permute.xlu0 %367
        %369 = vrot.lane.b32.xlu0 %v295, 4
        %v370 = vpop.permute.xlu0 %369
        %371 = vrot.lane.b32.xlu0 %v296, 4
        %v372 = vpop.permute.xlu0 %371
        %373 = vrot.lane.b32.xlu0 %v297, 4
        %v374 = vpop.permute.xlu0 %373
        %375 = vrot.lane.b32.xlu0 %v298, 4
        %v376 = vpop.permute.xlu0 %375
        %377 = vrot.lane.b32.xlu0 %v299, 4
        %v378 = vpop.permute.xlu0 %377
        %379 = vrot.lane.b32.xlu0 %v300, 4
        %v380 = vpop.permute.xlu0 %379
        %381 = vrot.lane.b32.xlu0 %v301, 4
        %v382 = vpop.permute.xlu0 %381
        %383 = vrot.lane.b32.xlu0 %v302, 4
        %v384 = vpop.permute.xlu0 %383
        %385 = vrot.lane.b32.xlu0 %v303, 4
        %v386 = vpop.permute.xlu0 %385
        %387 = vrot.lane.b32.xlu0 %v304, 4
        %v388 = vpop.permute.xlu0 %387
        %389 = vrot.lane.b32.xlu0 %v305, 4
        %v390 = vpop.permute.xlu0 %389
        %391 = vrot.lane.b32.xlu0 %v306, 4
        %v392 = vpop.permute.xlu0 %391
        %393 = vrot.lane.b32.xlu0 %v307, 4
        %v394 = vpop.permute.xlu0 %393
        %395 = vrot.lane.b32.xlu0 %v308, 4
        %v396 = vpop.permute.xlu0 %395
        %397 = vrot.lane.b32.xlu0 %v309, 4
        %v398 = vpop.permute.xlu0 %397
        %399 = vrot.lane.b32.xlu0 %v310, 4
        %v400 = vpop.permute.xlu0 %399
        %401 = vrot.lane.b32.xlu0 %v311, 4
        %v402 = vpop.permute.xlu0 %401
        %403 = vrot.lane.b32.xlu0 %v312, 4
        %v404 = vpop.permute.xlu0 %403
        %405 = vrot.lane.b32.xlu0 %v313, 4
        %v406 = vpop.permute.xlu0 %405
        %407 = vrot.lane.b32.xlu0 %v314, 4
        %v408 = vpop.permute.xlu0 %407
        %409 = vrot.lane.b32.xlu0 %v315, 4
        %v410 = vpop.permute.xlu0 %409
        %411 = vrot.lane.b32.xlu0 %v316, 4
        %v412 = vpop.permute.xlu0 %411
        %vm445 = vcmask 64544
        %446 = vst.msk [vmem:[#allocation2] sm:$0xff] %vm445, %v350
        %447 = vst.msk [vmem:[#allocation2 + $0x8] sm:$0xff] %vm445, %v352
        %448 = vst.msk [vmem:[#allocation2 + $0x10] sm:$0xff] %vm445, %v354
        %449 = vst.msk [vmem:[#allocation2 + $0x18] sm:$0xff] %vm445, %v356
        %450 = vst.msk [vmem:[#allocation2 + $0x20] sm:$0xff] %vm445, %v358
        %451 = vst.msk [vmem:[#allocation2 + $0x28] sm:$0xff] %vm445, %v360
        %452 = vst.msk [vmem:[#allocation2 + $0x30] sm:$0xff] %vm445, %v362
        %453 = vst.msk [vmem:[#allocation2 + $0x38] sm:$0xff] %vm445, %v364
        %454 = vst.msk [vmem:[#allocation2 + $0x40] sm:$0xff] %vm445, %v366
        %455 = vst.msk [vmem:[#allocation2 + $0x48] sm:$0xff] %vm445, %v368
        %456 = vst.msk [vmem:[#allocation2 + $0x50] sm:$0xff] %vm445, %v370
        %457 = vst.msk [vmem:[#allocation2 + $0x58] sm:$0xff] %vm445, %v372
        %458 = vst.msk [vmem:[#allocation2 + $0x60] sm:$0xff] %vm445, %v374
        %459 = vst.msk [vmem:[#allocation2 + $0x68] sm:$0xff] %vm445, %v376
        %460 = vst.msk [vmem:[#allocation2 + $0x70] sm:$0xff] %vm445, %v378
        %461 = vst.msk [vmem:[#allocation2 + $0x78] sm:$0xff] %vm445, %v380
        %462 = vst.msk [vmem:[#allocation2 + $0x80] sm:$0xff] %vm445, %v382
        %463 = vst.msk [vmem:[#allocation2 + $0x88] sm:$0xff] %vm445, %v384
        %464 = vst.msk [vmem:[#allocation2 + $0x90] sm:$0xff] %vm445, %v386
        %465 = vst.msk [vmem:[#allocation2 + $0x98] sm:$0xff] %vm445, %v388
        %466 = vst.msk [vmem:[#allocation2 + $0xa0] sm:$0xff] %vm445, %v390
        %467 = vst.msk [vmem:[#allocation2 + $0xa8] sm:$0xff] %vm445, %v392
        %468 = vst.msk [vmem:[#allocation2 + $0xb0] sm:$0xff] %vm445, %v394
        %469 = vst.msk [vmem:[#allocation2 + $0xb8] sm:$0xff] %vm445, %v396
        %470 = vst.msk [vmem:[#allocation2 + $0xc0] sm:$0xff] %vm445, %v398
        %471 = vst.msk [vmem:[#allocation2 + $0xc8] sm:$0xff] %vm445, %v400
        %472 = vst.msk [vmem:[#allocation2 + $0xd0] sm:$0xff] %vm445, %v402
        %473 = vst.msk [vmem:[#allocation2 + $0xd8] sm:$0xff] %vm445, %v404
        %474 = vst.msk [vmem:[#allocation2 + $0xe0] sm:$0xff] %vm445, %v406
        %475 = vst.msk [vmem:[#allocation2 + $0xe8] sm:$0xff] %vm445, %v408
        %476 = vst.msk [vmem:[#allocation2 + $0xf0] sm:$0xff] %vm445, %v410
        %477 = vst.msk [vmem:[#allocation2 + $0xf8] sm:$0xff] %vm445, %v412
        %v478 = vld [vmem:[%s219 + $0x2] sm:$0xff]
        %v479 = vld [vmem:[%s219 + $0xa] sm:$0xff]
        %v480 = vld [vmem:[%s219 + $0x1a] sm:$0xff]
        %v481 = vld [vmem:[%s219 + $0x22] sm:$0xff]
        %v482 = vld [vmem:[%s219 + $0x32] sm:$0xff]
        %v483 = vld [vmem:[%s219 + $0x3a] sm:$0xff]
        %v484 = vld [vmem:[%s219 + $0x4a] sm:$0xff]
        %v485 = vld [vmem:[%s219 + $0x52] sm:$0xff]
        %v486 = vld [vmem:[%s219 + $0x62] sm:$0xff]
        %v487 = vld [vmem:[%s219 + $0x6a] sm:$0xff]
        %v488 = vld [vmem:[%s219 + $0x7a] sm:$0xff]
        %v489 = vld [vmem:[%s219 + $0x82] sm:$0xff]
        %v490 = vld [vmem:[%s219 + $0x92] sm:$0xff]
        %v491 = vld [vmem:[%s219 + $0x9a] sm:$0xff]
        %v492 = vld [vmem:[%s219 + $0xaa] sm:$0xff]
        %v493 = vld [vmem:[%s219 + $0xb2] sm:$0xff]
        %v494 = vld [vmem:[%s219 + $0xc2] sm:$0xff]
        %v495 = vld [vmem:[%s219 + $0xca] sm:$0xff]
        %v496 = vld [vmem:[%s219 + $0xda] sm:$0xff]
        %v497 = vld [vmem:[%s219 + $0xe2] sm:$0xff]
        %v498 = vld [vmem:[%s219 + $0xf2] sm:$0xff]
        %v499 = vld [vmem:[%s219 + $0xfa] sm:$0xff]
        %v500 = vld [vmem:[%s219 + $0x10a] sm:$0xff]
        %v501 = vld [vmem:[%s219 + $0x112] sm:$0xff]
        %v502 = vld [vmem:[%s219 + $0x122] sm:$0xff]
        %v503 = vld [vmem:[%s219 + $0x12a] sm:$0xff]
        %v504 = vld [vmem:[%s219 + $0x13a] sm:$0xff]
        %v505 = vld [vmem:[%s219 + $0x142] sm:$0xff]
        %v506 = vld [vmem:[%s219 + $0x152] sm:$0xff]
        %v507 = vld [vmem:[%s219 + $0x15a] sm:$0xff]
        %v508 = vld [vmem:[%s219 + $0x16a] sm:$0xff]
        %v509 = vld [vmem:[%s219 + $0x172] sm:$0xff]
        %542 = vrot.lane.b32.xlu0 %v478, 8
        %v543 = vpop.permute.xlu0 %542
        %544 = vrot.lane.b32.xlu0 %v479, 8
        %v545 = vpop.permute.xlu0 %544
        %546 = vrot.lane.b32.xlu0 %v480, 8
        %v547 = vpop.permute.xlu0 %546
        %548 = vrot.lane.b32.xlu0 %v481, 8
        %v549 = vpop.permute.xlu0 %548
        %550 = vrot.lane.b32.xlu0 %v482, 8
        %v551 = vpop.permute.xlu0 %550
        %552 = vrot.lane.b32.xlu0 %v483, 8
        %v553 = vpop.permute.xlu0 %552
        %554 = vrot.lane.b32.xlu0 %v484, 8
        %v555 = vpop.permute.xlu0 %554
        %556 = vrot.lane.b32.xlu0 %v485, 8
        %v557 = vpop.permute.xlu0 %556
        %558 = vrot.lane.b32.xlu0 %v486, 8
        %v559 = vpop.permute.xlu0 %558
        %560 = vrot.lane.b32.xlu0 %v487, 8
        %v561 = vpop.permute.xlu0 %560
        %562 = vrot.lane.b32.xlu0 %v488, 8
        %v563 = vpop.permute.xlu0 %562
        %564 = vrot.lane.b32.xlu0 %v489, 8
        %v565 = vpop.permute.xlu0 %564
        %566 = vrot.lane.b32.xlu0 %v490, 8
        %v567 = vpop.permute.xlu0 %566
        %568 = vrot.lane.b32.xlu0 %v491, 8
        %v569 = vpop.permute.xlu0 %568
        %570 = vrot.lane.b32.xlu0 %v492, 8
        %v571 = vpop.permute.xlu0 %570
        %572 = vrot.lane.b32.xlu0 %v493, 8
        %v573 = vpop.permute.xlu0 %572
        %574 = vrot.lane.b32.xlu0 %v494, 8
        %v575 = vpop.permute.xlu0 %574
        %576 = vrot.lane.b32.xlu0 %v495, 8
        %v577 = vpop.permute.xlu0 %576
        %578 = vrot.lane.b32.xlu0 %v496, 8
        %v579 = vpop.permute.xlu0 %578
        %580 = vrot.lane.b32.xlu0 %v497, 8
        %v581 = vpop.permute.xlu0 %580
        %582 = vrot.lane.b32.xlu0 %v498, 8
        %v583 = vpop.permute.xlu0 %582
        %584 = vrot.lane.b32.xlu0 %v499, 8
        %v585 = vpop.permute.xlu0 %584
        %586 = vrot.lane.b32.xlu0 %v500, 8
        %v587 = vpop.permute.xlu0 %586
        %588 = vrot.lane.b32.xlu0 %v501, 8
        %v589 = vpop.permute.xlu0 %588
        %590 = vrot.lane.b32.xlu0 %v502, 8
        %v591 = vpop.permute.xlu0 %590
        %592 = vrot.lane.b32.xlu0 %v503, 8
        %v593 = vpop.permute.xlu0 %592
        %594 = vrot.lane.b32.xlu0 %v504, 8
        %v595 = vpop.permute.xlu0 %594
        %596 = vrot.lane.b32.xlu0 %v505, 8
        %v597 = vpop.permute.xlu0 %596
        %598 = vrot.lane.b32.xlu0 %v506, 8
        %v599 = vpop.permute.xlu0 %598
        %600 = vrot.lane.b32.xlu0 %v507, 8
        %v601 = vpop.permute.xlu0 %600
        %602 = vrot.lane.b32.xlu0 %v508, 8
        %v603 = vpop.permute.xlu0 %602
        %604 = vrot.lane.b32.xlu0 %v509, 8
        %v605 = vpop.permute.xlu0 %604
        %vm638 = vcmask 97344
        %639 = vst.msk [vmem:[#allocation2] sm:$0xff] %vm638, %v543
        %640 = vst.msk [vmem:[#allocation2 + $0x8] sm:$0xff] %vm638, %v545
        %641 = vst.msk [vmem:[#allocation2 + $0x10] sm:$0xff] %vm638, %v547
        %642 = vst.msk [vmem:[#allocation2 + $0x18] sm:$0xff] %vm638, %v549
        %643 = vst.msk [vmem:[#allocation2 + $0x20] sm:$0xff] %vm638, %v551
        %644 = vst.msk [vmem:[#allocation2 + $0x28] sm:$0xff] %vm638, %v553
        %645 = vst.msk [vmem:[#allocation2 + $0x30] sm:$0xff] %vm638, %v555
        %646 = vst.msk [vmem:[#allocation2 + $0x38] sm:$0xff] %vm638, %v557
        %647 = vst.msk [vmem:[#allocation2 + $0x40] sm:$0xff] %vm638, %v559
        %648 = vst.msk [vmem:[#allocation2 + $0x48] sm:$0xff] %vm638, %v561
        %649 = vst.msk [vmem:[#allocation2 + $0x50] sm:$0xff] %vm638, %v563
        %650 = vst.msk [vmem:[#allocation2 + $0x58] sm:$0xff] %vm638, %v565
        %651 = vst.msk [vmem:[#allocation2 + $0x60] sm:$0xff] %vm638, %v567
        %652 = vst.msk [vmem:[#allocation2 + $0x68] sm:$0xff] %vm638, %v569
        %653 = vst.msk [vmem:[#allocation2 + $0x70] sm:$0xff] %vm638, %v571
        %654 = vst.msk [vmem:[#allocation2 + $0x78] sm:$0xff] %vm638, %v573
        %655 = vst.msk [vmem:[#allocation2 + $0x80] sm:$0xff] %vm638, %v575
        %656 = vst.msk [vmem:[#allocation2 + $0x88] sm:$0xff] %vm638, %v577
        %657 = vst.msk [vmem:[#allocation2 + $0x90] sm:$0xff] %vm638, %v579
        %658 = vst.msk [vmem:[#allocation2 + $0x98] sm:$0xff] %vm638, %v581
        %659 = vst.msk [vmem:[#allocation2 + $0xa0] sm:$0xff] %vm638, %v583
        %660 = vst.msk [vmem:[#allocation2 + $0xa8] sm:$0xff] %vm638, %v585
        %661 = vst.msk [vmem:[#allocation2 + $0xb0] sm:$0xff] %vm638, %v587
        %662 = vst.msk [vmem:[#allocation2 + $0xb8] sm:$0xff] %vm638, %v589
        %663 = vst.msk [vmem:[#allocation2 + $0xc0] sm:$0xff] %vm638, %v591
        %664 = vst.msk [vmem:[#allocation2 + $0xc8] sm:$0xff] %vm638, %v593
        %665 = vst.msk [vmem:[#allocation2 + $0xd0] sm:$0xff] %vm638, %v595
        %666 = vst.msk [vmem:[#allocation2 + $0xd8] sm:$0xff] %vm638, %v597
        %667 = vst.msk [vmem:[#allocation2 + $0xe0] sm:$0xff] %vm638, %v599
        %668 = vst.msk [vmem:[#allocation2 + $0xe8] sm:$0xff] %vm638, %v601
        %669 = vst.msk [vmem:[#allocation2 + $0xf0] sm:$0xff] %vm638, %v603
        %670 = vst.msk [vmem:[#allocation2 + $0xf8] sm:$0xff] %vm638, %v605
        %s671 = sadd.s32 %s184, 1
        %s672 = smul.u32 %s671, 24
        %s673 = scalar_lea.vmem %s182, %s672
        %v674 = vld [vmem:[%s673] sm:$0xff]
        %v675 = vld [vmem:[%s673 + $0x8] sm:$0xff]
        %v676 = vld [vmem:[%s673 + $0x18] sm:$0xff]
        %v677 = vld [vmem:[%s673 + $0x20] sm:$0xff]
        %v678 = vld [vmem:[%s673 + $0x30] sm:$0xff]
        %v679 = vld [vmem:[%s673 + $0x38] sm:$0xff]
        %v680 = vld [vmem:[%s673 + $0x48] sm:$0xff]
        %v681 = vld [vmem:[%s673 + $0x50] sm:$0xff]
        %v682 = vld [vmem:[%s673 + $0x60] sm:$0xff]
        %v683 = vld [vmem:[%s673 + $0x68] sm:$0xff]
        %v684 = vld [vmem:[%s673 + $0x78] sm:$0xff]
        %v685 = vld [vmem:[%s673 + $0x80] sm:$0xff]
        %v686 = vld [vmem:[%s673 + $0x90] sm:$0xff]
        %v687 = vld [vmem:[%s673 + $0x98] sm:$0xff]
        %v688 = vld [vmem:[%s673 + $0xa8] sm:$0xff]
        %v689 = vld [vmem:[%s673 + $0xb0] sm:$0xff]
        %v690 = vld [vmem:[%s673 + $0xc0] sm:$0xff]
        %v691 = vld [vmem:[%s673 + $0xc8] sm:$0xff]
        %v692 = vld [vmem:[%s673 + $0xd8] sm:$0xff]
        %v693 = vld [vmem:[%s673 + $0xe0] sm:$0xff]
        %v694 = vld [vmem:[%s673 + $0xf0] sm:$0xff]
        %v695 = vld [vmem:[%s673 + $0xf8] sm:$0xff]
        %v696 = vld [vmem:[%s673 + $0x108] sm:$0xff]
        %v697 = vld [vmem:[%s673 + $0x110] sm:$0xff]
        %v698 = vld [vmem:[%s673 + $0x120] sm:$0xff]
        %v699 = vld [vmem:[%s673 + $0x128] sm:$0xff]
        %v700 = vld [vmem:[%s673 + $0x138] sm:$0xff]
        %v701 = vld [vmem:[%s673 + $0x140] sm:$0xff]
        %v702 = vld [vmem:[%s673 + $0x150] sm:$0xff]
        %v703 = vld [vmem:[%s673 + $0x158] sm:$0xff]
        %v704 = vld [vmem:[%s673 + $0x168] sm:$0xff]
        %v705 = vld [vmem:[%s673 + $0x170] sm:$0xff]
        %738 = vrot.lane.b32.xlu0 %v674, 12
        %v739 = vpop.permute.xlu0 %738
        %740 = vrot.lane.b32.xlu0 %v675, 12
        %v741 = vpop.permute.xlu0 %740
        %742 = vrot.lane.b32.xlu0 %v676, 12
        %v743 = vpop.permute.xlu0 %742
        %744 = vrot.lane.b32.xlu0 %v677, 12
        %v745 = vpop.permute.xlu0 %744
        %746 = vrot.lane.b32.xlu0 %v678, 12
        %v747 = vpop.permute.xlu0 %746
        %748 = vrot.lane.b32.xlu0 %v679, 12
        %v749 = vpop.permute.xlu0 %748
        %750 = vrot.lane.b32.xlu0 %v680, 12
        %v751 = vpop.permute.xlu0 %750
        %752 = vrot.lane.b32.xlu0 %v681, 12
        %v753 = vpop.permute.xlu0 %752
        %754 = vrot.lane.b32.xlu0 %v682, 12
        %v755 = vpop.permute.xlu0 %754
        %756 = vrot.lane.b32.xlu0 %v683, 12
        %v757 = vpop.permute.xlu0 %756
        %758 = vrot.lane.b32.xlu0 %v684, 12
        %v759 = vpop.permute.xlu0 %758
        %760 = vrot.lane.b32.xlu0 %v685, 12
        %v761 = vpop.permute.xlu0 %760
        %762 = vrot.lane.b32.xlu0 %v686, 12
        %v763 = vpop.permute.xlu0 %762
        %764 = vrot.lane.b32.xlu0 %v687, 12
        %v765 = vpop.permute.xlu0 %764
        %766 = vrot.lane.b32.xlu0 %v688, 12
        %v767 = vpop.permute.xlu0 %766
        %768 = vrot.lane.b32.xlu0 %v689, 12
        %v769 = vpop.permute.xlu0 %768
        %770 = vrot.lane.b32.xlu0 %v690, 12
        %v771 = vpop.permute.xlu0 %770
        %772 = vrot.lane.b32.xlu0 %v691, 12
        %v773 = vpop.permute.xlu0 %772
        %774 = vrot.lane.b32.xlu0 %v692, 12
        %v775 = vpop.permute.xlu0 %774
        %776 = vrot.lane.b32.xlu0 %v693, 12
        %v777 = vpop.permute.xlu0 %776
        %778 = vrot.lane.b32.xlu0 %v694, 12
        %v779 = vpop.permute.xlu0 %778
        %780 = vrot.lane.b32.xlu0 %v695, 12
        %v781 = vpop.permute.xlu0 %780
        %782 = vrot.lane.b32.xlu0 %v696, 12
        %v783 = vpop.permute.xlu0 %782
        %784 = vrot.lane.b32.xlu0 %v697, 12
        %v785 = vpop.permute.xlu0 %784
        %786 = vrot.lane.b32.xlu0 %v698, 12
        %v787 = vpop.permute.xlu0 %786
        %788 = vrot.lane.b32.xlu0 %v699, 12
        %v789 = vpop.permute.xlu0 %788
        %790 = vrot.lane.b32.xlu0 %v700, 12
        %v791 = vpop.permute.xlu0 %790
        %792 = vrot.lane.b32.xlu0 %v701, 12
        %v793 = vpop.permute.xlu0 %792
        %794 = vrot.lane.b32.xlu0 %v702, 12
        %v795 = vpop.permute.xlu0 %794
        %796 = vrot.lane.b32.xlu0 %v703, 12
        %v797 = vpop.permute.xlu0 %796
        %798 = vrot.lane.b32.xlu0 %v704, 12
        %v799 = vpop.permute.xlu0 %798
        %800 = vrot.lane.b32.xlu0 %v705, 12
        %v801 = vpop.permute.xlu0 %800
        %vm834 = vcmask 130144
        %835 = vst.msk [vmem:[#allocation2] sm:$0xff] %vm834, %v739
        %836 = vst.msk [vmem:[#allocation2 + $0x8] sm:$0xff] %vm834, %v741
        %837 = vst.msk [vmem:[#allocation2 + $0x10] sm:$0xff] %vm834, %v743
        %838 = vst.msk [vmem:[#allocation2 + $0x18] sm:$0xff] %vm834, %v745
        %839 = vst.msk [vmem:[#allocation2 + $0x20] sm:$0xff] %vm834, %v747
        %840 = vst.msk [vmem:[#allocation2 + $0x28] sm:$0xff] %vm834, %v749
        %841 = vst.msk [vmem:[#allocation2 + $0x30] sm:$0xff] %vm834, %v751
        %842 = vst.msk [vmem:[#allocation2 + $0x38] sm:$0xff] %vm834, %v753
        %843 = vst.msk [vmem:[#allocation2 + $0x40] sm:$0xff] %vm834, %v755
        %844 = vst.msk [vmem:[#allocation2 + $0x48] sm:$0xff] %vm834, %v757
        %845 = vst.msk [vmem:[#allocation2 + $0x50] sm:$0xff] %vm834, %v759
        %846 = vst.msk [vmem:[#allocation2 + $0x58] sm:$0xff] %vm834, %v761
        %847 = vst.msk [vmem:[#allocation2 + $0x60] sm:$0xff] %vm834, %v763
        %848 = vst.msk [vmem:[#allocation2 + $0x68] sm:$0xff] %vm834, %v765
        %849 = vst.msk [vmem:[#allocation2 + $0x70] sm:$0xff] %vm834, %v767
        %850 = vst.msk [vmem:[#allocation2 + $0x78] sm:$0xff] %vm834, %v769
        %851 = vst.msk [vmem:[#allocation2 + $0x80] sm:$0xff] %vm834, %v771
        %852 = vst.msk [vmem:[#allocation2 + $0x88] sm:$0xff] %vm834, %v773
        %853 = vst.msk [vmem:[#allocation2 + $0x90] sm:$0xff] %vm834, %v775
        %854 = vst.msk [vmem:[#allocation2 + $0x98] sm:$0xff] %vm834, %v777
        %855 = vst.msk [vmem:[#allocation2 + $0xa0] sm:$0xff] %vm834, %v779
        %856 = vst.msk [vmem:[#allocation2 + $0xa8] sm:$0xff] %vm834, %v781
        %857 = vst.msk [vmem:[#allocation2 + $0xb0] sm:$0xff] %vm834, %v783
        %858 = vst.msk [vmem:[#allocation2 + $0xb8] sm:$0xff] %vm834, %v785
        %859 = vst.msk [vmem:[#allocation2 + $0xc0] sm:$0xff] %vm834, %v787
        %860 = vst.msk [vmem:[#allocation2 + $0xc8] sm:$0xff] %vm834, %v789
        %861 = vst.msk [vmem:[#allocation2 + $0xd0] sm:$0xff] %vm834, %v791
        %862 = vst.msk [vmem:[#allocation2 + $0xd8] sm:$0xff] %vm834, %v793
        %863 = vst.msk [vmem:[#allocation2 + $0xe0] sm:$0xff] %vm834, %v795
        %864 = vst.msk [vmem:[#allocation2 + $0xe8] sm:$0xff] %vm834, %v797
        %865 = vst.msk [vmem:[#allocation2 + $0xf0] sm:$0xff] %vm834, %v799
        %866 = vst.msk [vmem:[#allocation2 + $0xf8] sm:$0xff] %vm834, %v801
        %v867 = vld [vmem:[%s673 + $0x1] sm:$0xff]
        %v868 = vld [vmem:[%s673 + $0x9] sm:$0xff]
        %v869 = vld [vmem:[%s673 + $0x19] sm:$0xff]
        %v870 = vld [vmem:[%s673 + $0x21] sm:$0xff]
        %v871 = vld [vmem:[%s673 + $0x31] sm:$0xff]
        %v872 = vld [vmem:[%s673 + $0x39] sm:$0xff]
        %v873 = vld [vmem:[%s673 + $0x49] sm:$0xff]
        %v874 = vld [vmem:[%s673 + $0x51] sm:$0xff]
        %v875 = vld [vmem:[%s673 + $0x61] sm:$0xff]
        %v876 = vld [vmem:[%s673 + $0x69] sm:$0xff]
        %v877 = vld [vmem:[%s673 + $0x79] sm:$0xff]
        %v878 = vld [vmem:[%s673 + $0x81] sm:$0xff]
        %v879 = vld [vmem:[%s673 + $0x91] sm:$0xff]
        %v880 = vld [vmem:[%s673 + $0x99] sm:$0xff]
        %v881 = vld [vmem:[%s673 + $0xa9] sm:$0xff]
        %v882 = vld [vmem:[%s673 + $0xb1] sm:$0xff]
        %v883 = vld [vmem:[%s673 + $0xc1] sm:$0xff]
        %v884 = vld [vmem:[%s673 + $0xc9] sm:$0xff]
        %v885 = vld [vmem:[%s673 + $0xd9] sm:$0xff]
        %v886 = vld [vmem:[%s673 + $0xe1] sm:$0xff]
        %v887 = vld [vmem:[%s673 + $0xf1] sm:$0xff]
        %v888 = vld [vmem:[%s673 + $0xf9] sm:$0xff]
        %v889 = vld [vmem:[%s673 + $0x109] sm:$0xff]
        %v890 = vld [vmem:[%s673 + $0x111] sm:$0xff]
        %v891 = vld [vmem:[%s673 + $0x121] sm:$0xff]
        %v892 = vld [vmem:[%s673 + $0x129] sm:$0xff]
        %v893 = vld [vmem:[%s673 + $0x139] sm:$0xff]
        %v894 = vld [vmem:[%s673 + $0x141] sm:$0xff]
        %v895 = vld [vmem:[%s673 + $0x151] sm:$0xff]
        %v896 = vld [vmem:[%s673 + $0x159] sm:$0xff]
        %v897 = vld [vmem:[%s673 + $0x169] sm:$0xff]
        %v898 = vld [vmem:[%s673 + $0x171] sm:$0xff]
        %931 = vrot.lane.b32.xlu0 %v867, 16
        %v932 = vpop.permute.xlu0 %931
        %933 = vrot.lane.b32.xlu0 %v868, 16
        %v934 = vpop.permute.xlu0 %933
        %935 = vrot.lane.b32.xlu0 %v869, 16
        %v936 = vpop.permute.xlu0 %935
        %937 = vrot.lane.b32.xlu0 %v870, 16
        %v938 = vpop.permute.xlu0 %937
        %939 = vrot.lane.b32.xlu0 %v871, 16
        %v940 = vpop.permute.xlu0 %939
        %941 = vrot.lane.b32.xlu0 %v872, 16
        %v942 = vpop.permute.xlu0 %941
        %943 = vrot.lane.b32.xlu0 %v873, 16
        %v944 = vpop.permute.xlu0 %943
        %945 = vrot.lane.b32.xlu0 %v874, 16
        %v946 = vpop.permute.xlu0 %945
        %947 = vrot.lane.b32.xlu0 %v875, 16
        %v948 = vpop.permute.xlu0 %947
        %949 = vrot.lane.b32.xlu0 %v876, 16
        %v950 = vpop.permute.xlu0 %949
        %951 = vrot.lane.b32.xlu0 %v877, 16
        %v952 = vpop.permute.xlu0 %951
        %953 = vrot.lane.b32.xlu0 %v878, 16
        %v954 = vpop.permute.xlu0 %953
        %955 = vrot.lane.b32.xlu0 %v879, 16
        %v956 = vpop.permute.xlu0 %955
        %957 = vrot.lane.b32.xlu0 %v880, 16
        %v958 = vpop.permute.xlu0 %957
        %959 = vrot.lane.b32.xlu0 %v881, 16
        %v960 = vpop.permute.xlu0 %959
        %961 = vrot.lane.b32.xlu0 %v882, 16
        %v962 = vpop.permute.xlu0 %961
        %963 = vrot.lane.b32.xlu0 %v883, 16
        %v964 = vpop.permute.xlu0 %963
        %965 = vrot.lane.b32.xlu0 %v884, 16
        %v966 = vpop.permute.xlu0 %965
        %967 = vrot.lane.b32.xlu0 %v885, 16
        %v968 = vpop.permute.xlu0 %967
        %969 = vrot.lane.b32.xlu0 %v886, 16
        %v970 = vpop.permute.xlu0 %969
        %971 = vrot.lane.b32.xlu0 %v887, 16
        %v972 = vpop.permute.xlu0 %971
        %973 = vrot.lane.b32.xlu0 %v888, 16
        %v974 = vpop.permute.xlu0 %973
        %975 = vrot.lane.b32.xlu0 %v889, 16
        %v976 = vpop.permute.xlu0 %975
        %977 = vrot.lane.b32.xlu0 %v890, 16
        %v978 = vpop.permute.xlu0 %977
        %979 = vrot.lane.b32.xlu0 %v891, 16
        %v980 = vpop.permute.xlu0 %979
        %981 = vrot.lane.b32.xlu0 %v892, 16
        %v982 = vpop.permute.xlu0 %981
        %983 = vrot.lane.b32.xlu0 %v893, 16
        %v984 = vpop.permute.xlu0 %983
        %985 = vrot.lane.b32.xlu0 %v894, 16
        %v986 = vpop.permute.xlu0 %985
        %987 = vrot.lane.b32.xlu0 %v895, 16
        %v988 = vpop.permute.xlu0 %987
        %989 = vrot.lane.b32.xlu0 %v896, 16
        %v990 = vpop.permute.xlu0 %989
        %991 = vrot.lane.b32.xlu0 %v897, 16
        %v992 = vpop.permute.xlu0 %991
        %993 = vrot.lane.b32.xlu0 %v898, 16
        %v994 = vpop.permute.xlu0 %993
        %vm1027 = vcmask 162944
        %1028 = vst.msk [vmem:[#allocation2] sm:$0xff] %vm1027, %v932
        %1029 = vst.msk [vmem:[#allocation2 + $0x8] sm:$0xff] %vm1027, %v934
        %1030 = vst.msk [vmem:[#allocation2 + $0x10] sm:$0xff] %vm1027, %v936
        %1031 = vst.msk [vmem:[#allocation2 + $0x18] sm:$0xff] %vm1027, %v938
        %1032 = vst.msk [vmem:[#allocation2 + $0x20] sm:$0xff] %vm1027, %v940
        %1033 = vst.msk [vmem:[#allocation2 + $0x28] sm:$0xff] %vm1027, %v942
        %1034 = vst.msk [vmem:[#allocation2 + $0x30] sm:$0xff] %vm1027, %v944
        %1035 = vst.msk [vmem:[#allocation2 + $0x38] sm:$0xff] %vm1027, %v946
        %1036 = vst.msk [vmem:[#allocation2 + $0x40] sm:$0xff] %vm1027, %v948
        %1037 = vst.msk [vmem:[#allocation2 + $0x48] sm:$0xff] %vm1027, %v950
        %1038 = vst.msk [vmem:[#allocation2 + $0x50] sm:$0xff] %vm1027, %v952
        %1039 = vst.msk [vmem:[#allocation2 + $0x58] sm:$0xff] %vm1027, %v954
        %1040 = vst.msk [vmem:[#allocation2 + $0x60] sm:$0xff] %vm1027, %v956
        %1041 = vst.msk [vmem:[#allocation2 + $0x68] sm:$0xff] %vm1027, %v958
        %1042 = vst.msk [vmem:[#allocation2 + $0x70] sm:$0xff] %vm1027, %v960
        %1043 = vst.msk [vmem:[#allocation2 + $0x78] sm:$0xff] %vm1027, %v962
        %1044 = vst.msk [vmem:[#allocation2 + $0x80] sm:$0xff] %vm1027, %v964
        %1045 = vst.msk [vmem:[#allocation2 + $0x88] sm:$0xff] %vm1027, %v966
        %1046 = vst.msk [vmem:[#allocation2 + $0x90] sm:$0xff] %vm1027, %v968
        %1047 = vst.msk [vmem:[#allocation2 + $0x98] sm:$0xff] %vm1027, %v970
        %1048 = vst.msk [vmem:[#allocation2 + $0xa0] sm:$0xff] %vm1027, %v972
        %1049 = vst.msk [vmem:[#allocation2 + $0xa8] sm:$0xff] %vm1027, %v974
        %1050 = vst.msk [vmem:[#allocation2 + $0xb0] sm:$0xff] %vm1027, %v976
        %1051 = vst.msk [vmem:[#allocation2 + $0xb8] sm:$0xff] %vm1027, %v978
        %1052 = vst.msk [vmem:[#allocation2 + $0xc0] sm:$0xff] %vm1027, %v980
        %1053 = vst.msk [vmem:[#allocation2 + $0xc8] sm:$0xff] %vm1027, %v982
        %1054 = vst.msk [vmem:[#allocation2 + $0xd0] sm:$0xff] %vm1027, %v984
        %1055 = vst.msk [vmem:[#allocation2 + $0xd8] sm:$0xff] %vm1027, %v986
        %1056 = vst.msk [vmem:[#allocation2 + $0xe0] sm:$0xff] %vm1027, %v988
        %1057 = vst.msk [vmem:[#allocation2 + $0xe8] sm:$0xff] %vm1027, %v990
        %1058 = vst.msk [vmem:[#allocation2 + $0xf0] sm:$0xff] %vm1027, %v992
        %1059 = vst.msk [vmem:[#allocation2 + $0xf8] sm:$0xff] %vm1027, %v994
        %v1060 = vld [vmem:[%s673 + $0x2] sm:$0xff]
        %v1061 = vld [vmem:[%s673 + $0xa] sm:$0xff]
        %v1062 = vld [vmem:[%s673 + $0x1a] sm:$0xff]
        %v1063 = vld [vmem:[%s673 + $0x22] sm:$0xff]
        %v1064 = vld [vmem:[%s673 + $0x32] sm:$0xff]
        %v1065 = vld [vmem:[%s673 + $0x3a] sm:$0xff]
        %v1066 = vld [vmem:[%s673 + $0x4a] sm:$0xff]
        %v1067 = vld [vmem:[%s673 + $0x52] sm:$0xff]
        %v1068 = vld [vmem:[%s673 + $0x62] sm:$0xff]
        %v1069 = vld [vmem:[%s673 + $0x6a] sm:$0xff]
        %v1070 = vld [vmem:[%s673 + $0x7a] sm:$0xff]
        %v1071 = vld [vmem:[%s673 + $0x82] sm:$0xff]
        %v1072 = vld [vmem:[%s673 + $0x92] sm:$0xff]
        %v1073 = vld [vmem:[%s673 + $0x9a] sm:$0xff]
        %v1074 = vld [vmem:[%s673 + $0xaa] sm:$0xff]
        %v1075 = vld [vmem:[%s673 + $0xb2] sm:$0xff]
        %v1076 = vld [vmem:[%s673 + $0xc2] sm:$0xff]
        %v1077 = vld [vmem:[%s673 + $0xca] sm:$0xff]
        %v1078 = vld [vmem:[%s673 + $0xda] sm:$0xff]
        %v1079 = vld [vmem:[%s673 + $0xe2] sm:$0xff]
        %v1080 = vld [vmem:[%s673 + $0xf2] sm:$0xff]
        %v1081 = vld [vmem:[%s673 + $0xfa] sm:$0xff]
        %v1082 = vld [vmem:[%s673 + $0x10a] sm:$0xff]
        %v1083 = vld [vmem:[%s673 + $0x112] sm:$0xff]
        %v1084 = vld [vmem:[%s673 + $0x122] sm:$0xff]
        %v1085 = vld [vmem:[%s673 + $0x12a] sm:$0xff]
        %v1086 = vld [vmem:[%s673 + $0x13a] sm:$0xff]
        %v1087 = vld [vmem:[%s673 + $0x142] sm:$0xff]
        %v1088 = vld [vmem:[%s673 + $0x152] sm:$0xff]
        %v1089 = vld [vmem:[%s673 + $0x15a] sm:$0xff]
        %v1090 = vld [vmem:[%s673 + $0x16a] sm:$0xff]
        %v1091 = vld [vmem:[%s673 + $0x172] sm:$0xff]
        %1124 = vrot.lane.b32.xlu0 %v1060, 20
        %v1125 = vpop.permute.xlu0 %1124
        %1126 = vrot.lane.b32.xlu0 %v1061, 20
        %v1127 = vpop.permute.xlu0 %1126
        %1128 = vrot.lane.b32.xlu0 %v1062, 20
        %v1129 = vpop.permute.xlu0 %1128
        %1130 = vrot.lane.b32.xlu0 %v1063, 20
        %v1131 = vpop.permute.xlu0 %1130
        %1132 = vrot.lane.b32.xlu0 %v1064, 20
        %v1133 = vpop.permute.xlu0 %1132
        %1134 = vrot.lane.b32.xlu0 %v1065, 20
        %v1135 = vpop.permute.xlu0 %1134
        %1136 = vrot.lane.b32.xlu0 %v1066, 20
        %v1137 = vpop.permute.xlu0 %1136
        %1138 = vrot.lane.b32.xlu0 %v1067, 20
        %v1139 = vpop.permute.xlu0 %1138
        %1140 = vrot.lane.b32.xlu0 %v1068, 20
        %v1141 = vpop.permute.xlu0 %1140
        %1142 = vrot.lane.b32.xlu0 %v1069, 20
        %v1143 = vpop.permute.xlu0 %1142
        %1144 = vrot.lane.b32.xlu0 %v1070, 20
        %v1145 = vpop.permute.xlu0 %1144
        %1146 = vrot.lane.b32.xlu0 %v1071, 20
        %v1147 = vpop.permute.xlu0 %1146
        %1148 = vrot.lane.b32.xlu0 %v1072, 20
        %v1149 = vpop.permute.xlu0 %1148
        %1150 = vrot.lane.b32.xlu0 %v1073, 20
        %v1151 = vpop.permute.xlu0 %1150
        %1152 = vrot.lane.b32.xlu0 %v1074, 20
        %v1153 = vpop.permute.xlu0 %1152
        %1154 = vrot.lane.b32.xlu0 %v1075, 20
        %v1155 = vpop.permute.xlu0 %1154
        %1156 = vrot.lane.b32.xlu0 %v1076, 20
        %v1157 = vpop.permute.xlu0 %1156
        %1158 = vrot.lane.b32.xlu0 %v1077, 20
        %v1159 = vpop.permute.xlu0 %1158
        %1160 = vrot.lane.b32.xlu0 %v1078, 20
        %v1161 = vpop.permute.xlu0 %1160
        %1162 = vrot.lane.b32.xlu0 %v1079, 20
        %v1163 = vpop.permute.xlu0 %1162
        %1164 = vrot.lane.b32.xlu0 %v1080, 20
        %v1165 = vpop.permute.xlu0 %1164
        %1166 = vrot.lane.b32.xlu0 %v1081, 20
        %v1167 = vpop.permute.xlu0 %1166
        %1168 = vrot.lane.b32.xlu0 %v1082, 20
        %v1169 = vpop.permute.xlu0 %1168
        %1170 = vrot.lane.b32.xlu0 %v1083, 20
        %v1171 = vpop.permute.xlu0 %1170
        %1172 = vrot.lane.b32.xlu0 %v1084, 20
        %v1173 = vpop.permute.xlu0 %1172
        %1174 = vrot.lane.b32.xlu0 %v1085, 20
        %v1175 = vpop.permute.xlu0 %1174
        %1176 = vrot.lane.b32.xlu0 %v1086, 20
        %v1177 = vpop.permute.xlu0 %1176
        %1178 = vrot.lane.b32.xlu0 %v1087, 20
        %v1179 = vpop.permute.xlu0 %1178
        %1180 = vrot.lane.b32.xlu0 %v1088, 20
        %v1181 = vpop.permute.xlu0 %1180
        %1182 = vrot.lane.b32.xlu0 %v1089, 20
        %v1183 = vpop.permute.xlu0 %1182
        %1184 = vrot.lane.b32.xlu0 %v1090, 20
        %v1185 = vpop.permute.xlu0 %1184
        %1186 = vrot.lane.b32.xlu0 %v1091, 20
        %v1187 = vpop.permute.xlu0 %1186
        %vm1220 = vcmask 195744
        %1221 = vst.msk [vmem:[#allocation2] sm:$0xff] %vm1220, %v1125
        %1222 = vst.msk [vmem:[#allocation2 + $0x8] sm:$0xff] %vm1220, %v1127
        %1223 = vst.msk [vmem:[#allocation2 + $0x10] sm:$0xff] %vm1220, %v1129
        %1224 = vst.msk [vmem:[#allocation2 + $0x18] sm:$0xff] %vm1220, %v1131
        %1225 = vst.msk [vmem:[#allocation2 + $0x20] sm:$0xff] %vm1220, %v1133
        %1226 = vst.msk [vmem:[#allocation2 + $0x28] sm:$0xff] %vm1220, %v1135
        %1227 = vst.msk [vmem:[#allocation2 + $0x30] sm:$0xff] %vm1220, %v1137
        %1228 = vst.msk [vmem:[#allocation2 + $0x38] sm:$0xff] %vm1220, %v1139
        %1229 = vst.msk [vmem:[#allocation2 + $0x40] sm:$0xff] %vm1220, %v1141
        %1230 = vst.msk [vmem:[#allocation2 + $0x48] sm:$0xff] %vm1220, %v1143
        %1231 = vst.msk [vmem:[#allocation2 + $0x50] sm:$0xff] %vm1220, %v1145
        %1232 = vst.msk [vmem:[#allocation2 + $0x58] sm:$0xff] %vm1220, %v1147
        %1233 = vst.msk [vmem:[#allocation2 + $0x60] sm:$0xff] %vm1220, %v1149
        %1234 = vst.msk [vmem:[#allocation2 + $0x68] sm:$0xff] %vm1220, %v1151
        %1235 = vst.msk [vmem:[#allocation2 + $0x70] sm:$0xff] %vm1220, %v1153
        %1236 = vst.msk [vmem:[#allocation2 + $0x78] sm:$0xff] %vm1220, %v1155
        %1237 = vst.msk [vmem:[#allocation2 + $0x80] sm:$0xff] %vm1220, %v1157
        %1238 = vst.msk [vmem:[#allocation2 + $0x88] sm:$0xff] %vm1220, %v1159
        %1239 = vst.msk [vmem:[#allocation2 + $0x90] sm:$0xff] %vm1220, %v1161
        %1240 = vst.msk [vmem:[#allocation2 + $0x98] sm:$0xff] %vm1220, %v1163
        %1241 = vst.msk [vmem:[#allocation2 + $0xa0] sm:$0xff] %vm1220, %v1165
        %1242 = vst.msk [vmem:[#allocation2 + $0xa8] sm:$0xff] %vm1220, %v1167
        %1243 = vst.msk [vmem:[#allocation2 + $0xb0] sm:$0xff] %vm1220, %v1169
        %1244 = vst.msk [vmem:[#allocation2 + $0xb8] sm:$0xff] %vm1220, %v1171
        %1245 = vst.msk [vmem:[#allocation2 + $0xc0] sm:$0xff] %vm1220, %v1173
        %1246 = vst.msk [vmem:[#allocation2 + $0xc8] sm:$0xff] %vm1220, %v1175
        %1247 = vst.msk [vmem:[#allocation2 + $0xd0] sm:$0xff] %vm1220, %v1177
        %1248 = vst.msk [vmem:[#allocation2 + $0xd8] sm:$0xff] %vm1220, %v1179
        %1249 = vst.msk [vmem:[#allocation2 + $0xe0] sm:$0xff] %vm1220, %v1181
        %1250 = vst.msk [vmem:[#allocation2 + $0xe8] sm:$0xff] %vm1220, %v1183
        %1251 = vst.msk [vmem:[#allocation2 + $0xf0] sm:$0xff] %vm1220, %v1185
        %1252 = vst.msk [vmem:[#allocation2 + $0xf8] sm:$0xff] %vm1220, %v1187
        %s1253 = sadd.s32 %s184, 2
        %s1254 = smul.u32 %s1253, 24
        %s1255 = scalar_lea.vmem %s182, %s1254
        %v1256 = vld [vmem:[%s1255] sm:$0xff]
        %v1257 = vld [vmem:[%s1255 + $0x8] sm:$0xff]
        %v1258 = vld [vmem:[%s1255 + $0x18] sm:$0xff]
        %v1259 = vld [vmem:[%s1255 + $0x20] sm:$0xff]
        %v1260 = vld [vmem:[%s1255 + $0x30] sm:$0xff]
        %v1261 = vld [vmem:[%s1255 + $0x38] sm:$0xff]
        %v1262 = vld [vmem:[%s1255 + $0x48] sm:$0xff]
        %v1263 = vld [vmem:[%s1255 + $0x50] sm:$0xff]
        %v1264 = vld [vmem:[%s1255 + $0x60] sm:$0xff]
        %v1265 = vld [vmem:[%s1255 + $0x68] sm:$0xff]
        %v1266 = vld [vmem:[%s1255 + $0x78] sm:$0xff]
        %v1267 = vld [vmem:[%s1255 + $0x80] sm:$0xff]
        %v1268 = vld [vmem:[%s1255 + $0x90] sm:$0xff]
        %v1269 = vld [vmem:[%s1255 + $0x98] sm:$0xff]
        %v1270 = vld [vmem:[%s1255 + $0xa8] sm:$0xff]
        %v1271 = vld [vmem:[%s1255 + $0xb0] sm:$0xff]
        %v1272 = vld [vmem:[%s1255 + $0xc0] sm:$0xff]
        %v1273 = vld [vmem:[%s1255 + $0xc8] sm:$0xff]
        %v1274 = vld [vmem:[%s1255 + $0xd8] sm:$0xff]
        %v1275 = vld [vmem:[%s1255 + $0xe0] sm:$0xff]
        %v1276 = vld [vmem:[%s1255 + $0xf0] sm:$0xff]
        %v1277 = vld [vmem:[%s1255 + $0xf8] sm:$0xff]
        %v1278 = vld [vmem:[%s1255 + $0x108] sm:$0xff]
        %v1279 = vld [vmem:[%s1255 + $0x110] sm:$0xff]
        %v1280 = vld [vmem:[%s1255 + $0x120] sm:$0xff]
        %v1281 = vld [vmem:[%s1255 + $0x128] sm:$0xff]
        %v1282 = vld [vmem:[%s1255 + $0x138] sm:$0xff]
        %v1283 = vld [vmem:[%s1255 + $0x140] sm:$0xff]
        %v1284 = vld [vmem:[%s1255 + $0x150] sm:$0xff]
        %v1285 = vld [vmem:[%s1255 + $0x158] sm:$0xff]
        %v1286 = vld [vmem:[%s1255 + $0x168] sm:$0xff]
        %v1287 = vld [vmem:[%s1255 + $0x170] sm:$0xff]
        %1320 = vrot.lane.b32.xlu0 %v1256, 24
        %v1321 = vpop.permute.xlu0 %1320
        %1322 = vrot.lane.b32.xlu0 %v1257, 24
        %v1323 = vpop.permute.xlu0 %1322
        %1324 = vrot.lane.b32.xlu0 %v1258, 24
        %v1325 = vpop.permute.xlu0 %1324
        %1326 = vrot.lane.b32.xlu0 %v1259, 24
        %v1327 = vpop.permute.xlu0 %1326
        %1328 = vrot.lane.b32.xlu0 %v1260, 24
        %v1329 = vpop.permute.xlu0 %1328
        %1330 = vrot.lane.b32.xlu0 %v1261, 24
        %v1331 = vpop.permute.xlu0 %1330
        %1332 = vrot.lane.b32.xlu0 %v1262, 24
        %v1333 = vpop.permute.xlu0 %1332
        %1334 = vrot.lane.b32.xlu0 %v1263, 24
        %v1335 = vpop.permute.xlu0 %1334
        %1336 = vrot.lane.b32.xlu0 %v1264, 24
        %v1337 = vpop.permute.xlu0 %1336
        %1338 = vrot.lane.b32.xlu0 %v1265, 24
        %v1339 = vpop.permute.xlu0 %1338
        %1340 = vrot.lane.b32.xlu0 %v1266, 24
        %v1341 = vpop.permute.xlu0 %1340
        %1342 = vrot.lane.b32.xlu0 %v1267, 24
        %v1343 = vpop.permute.xlu0 %1342
        %1344 = vrot.lane.b32.xlu0 %v1268, 24
        %v1345 = vpop.permute.xlu0 %1344
        %1346 = vrot.lane.b32.xlu0 %v1269, 24
        %v1347 = vpop.permute.xlu0 %1346
        %1348 = vrot.lane.b32.xlu0 %v1270, 24
        %v1349 = vpop.permute.xlu0 %1348
        %1350 = vrot.lane.b32.xlu0 %v1271, 24
        %v1351 = vpop.permute.xlu0 %1350
        %1352 = vrot.lane.b32.xlu0 %v1272, 24
        %v1353 = vpop.permute.xlu0 %1352
        %1354 = vrot.lane.b32.xlu0 %v1273, 24
        %v1355 = vpop.permute.xlu0 %1354
        %1356 = vrot.lane.b32.xlu0 %v1274, 24
        %v1357 = vpop.permute.xlu0 %1356
        %1358 = vrot.lane.b32.xlu0 %v1275, 24
        %v1359 = vpop.permute.xlu0 %1358
        %1360 = vrot.lane.b32.xlu0 %v1276, 24
        %v1361 = vpop.permute.xlu0 %1360
        %1362 = vrot.lane.b32.xlu0 %v1277, 24
        %v1363 = vpop.permute.xlu0 %1362
        %1364 = vrot.lane.b32.xlu0 %v1278, 24
        %v1365 = vpop.permute.xlu0 %1364
        %1366 = vrot.lane.b32.xlu0 %v1279, 24
        %v1367 = vpop.permute.xlu0 %1366
        %1368 = vrot.lane.b32.xlu0 %v1280, 24
        %v1369 = vpop.permute.xlu0 %1368
        %1370 = vrot.lane.b32.xlu0 %v1281, 24
        %v1371 = vpop.permute.xlu0 %1370
        %1372 = vrot.lane.b32.xlu0 %v1282, 24
        %v1373 = vpop.permute.xlu0 %1372
        %1374 = vrot.lane.b32.xlu0 %v1283, 24
        %v1375 = vpop.permute.xlu0 %1374
        %1376 = vrot.lane.b32.xlu0 %v1284, 24
        %v1377 = vpop.permute.xlu0 %1376
        %1378 = vrot.lane.b32.xlu0 %v1285, 24
        %v1379 = vpop.permute.xlu0 %1378
        %1380 = vrot.lane.b32.xlu0 %v1286, 24
        %v1381 = vpop.permute.xlu0 %1380
        %1382 = vrot.lane.b32.xlu0 %v1287, 24
        %v1383 = vpop.permute.xlu0 %1382
        %vm1416 = vcmask 228544
        %1417 = vst.msk [vmem:[#allocation2] sm:$0xff] %vm1416, %v1321
        %1418 = vst.msk [vmem:[#allocation2 + $0x8] sm:$0xff] %vm1416, %v1323
        %1419 = vst.msk [vmem:[#allocation2 + $0x10] sm:$0xff] %vm1416, %v1325
        %1420 = vst.msk [vmem:[#allocation2 + $0x18] sm:$0xff] %vm1416, %v1327
        %1421 = vst.msk [vmem:[#allocation2 + $0x20] sm:$0xff] %vm1416, %v1329
        %1422 = vst.msk [vmem:[#allocation2 + $0x28] sm:$0xff] %vm1416, %v1331
        %1423 = vst.msk [vmem:[#allocation2 + $0x30] sm:$0xff] %vm1416, %v1333
        %1424 = vst.msk [vmem:[#allocation2 + $0x38] sm:$0xff] %vm1416, %v1335
        %1425 = vst.msk [vmem:[#allocation2 + $0x40] sm:$0xff] %vm1416, %v1337
        %1426 = vst.msk [vmem:[#allocation2 + $0x48] sm:$0xff] %vm1416, %v1339
        %1427 = vst.msk [vmem:[#allocation2 + $0x50] sm:$0xff] %vm1416, %v1341
        %1428 = vst.msk [vmem:[#allocation2 + $0x58] sm:$0xff] %vm1416, %v1343
        %1429 = vst.msk [vmem:[#allocation2 + $0x60] sm:$0xff] %vm1416, %v1345
        %1430 = vst.msk [vmem:[#allocation2 + $0x68] sm:$0xff] %vm1416, %v1347
        %1431 = vst.msk [vmem:[#allocation2 + $0x70] sm:$0xff] %vm1416, %v1349
        %1432 = vst.msk [vmem:[#allocation2 + $0x78] sm:$0xff] %vm1416, %v1351
        %1433 = vst.msk [vmem:[#allocation2 + $0x80] sm:$0xff] %vm1416, %v1353
        %1434 = vst.msk [vmem:[#allocation2 + $0x88] sm:$0xff] %vm1416, %v1355
        %1435 = vst.msk [vmem:[#allocation2 + $0x90] sm:$0xff] %vm1416, %v1357
        %1436 = vst.msk [vmem:[#allocation2 + $0x98] sm:$0xff] %vm1416, %v1359
        %1437 = vst.msk [vmem:[#allocation2 + $0xa0] sm:$0xff] %vm1416, %v1361
        %1438 = vst.msk [vmem:[#allocation2 + $0xa8] sm:$0xff] %vm1416, %v1363
        %1439 = vst.msk [vmem:[#allocation2 + $0xb0] sm:$0xff] %vm1416, %v1365
        %1440 = vst.msk [vmem:[#allocation2 + $0xb8] sm:$0xff] %vm1416, %v1367
        %1441 = vst.msk [vmem:[#allocation2 + $0xc0] sm:$0xff] %vm1416, %v1369
        %1442 = vst.msk [vmem:[#allocation2 + $0xc8] sm:$0xff] %vm1416, %v1371
        %1443 = vst.msk [vmem:[#allocation2 + $0xd0] sm:$0xff] %vm1416, %v1373
        %1444 = vst.msk [vmem:[#allocation2 + $0xd8] sm:$0xff] %vm1416, %v1375
        %1445 = vst.msk [vmem:[#allocation2 + $0xe0] sm:$0xff] %vm1416, %v1377
        %1446 = vst.msk [vmem:[#allocation2 + $0xe8] sm:$0xff] %vm1416, %v1379
        %1447 = vst.msk [vmem:[#allocation2 + $0xf0] sm:$0xff] %vm1416, %v1381
        %1448 = vst.msk [vmem:[#allocation2 + $0xf8] sm:$0xff] %vm1416, %v1383
        %v1449 = vld [vmem:[%s1255 + $0x1] sm:$0xff]
        %v1450 = vld [vmem:[%s1255 + $0x9] sm:$0xff]
        %v1451 = vld [vmem:[%s1255 + $0x19] sm:$0xff]
        %v1452 = vld [vmem:[%s1255 + $0x21] sm:$0xff]
        %v1453 = vld [vmem:[%s1255 + $0x31] sm:$0xff]
        %v1454 = vld [vmem:[%s1255 + $0x39] sm:$0xff]
        %v1455 = vld [vmem:[%s1255 + $0x49] sm:$0xff]
        %v1456 = vld [vmem:[%s1255 + $0x51] sm:$0xff]
        %v1457 = vld [vmem:[%s1255 + $0x61] sm:$0xff]
        %v1458 = vld [vmem:[%s1255 + $0x69] sm:$0xff]
        %v1459 = vld [vmem:[%s1255 + $0x79] sm:$0xff]
        %v1460 = vld [vmem:[%s1255 + $0x81] sm:$0xff]
        %v1461 = vld [vmem:[%s1255 + $0x91] sm:$0xff]
        %v1462 = vld [vmem:[%s1255 + $0x99] sm:$0xff]
        %v1463 = vld [vmem:[%s1255 + $0xa9] sm:$0xff]
        %v1464 = vld [vmem:[%s1255 + $0xb1] sm:$0xff]
        %v1465 = vld [vmem:[%s1255 + $0xc1] sm:$0xff]
        %v1466 = vld [vmem:[%s1255 + $0xc9] sm:$0xff]
        %v1467 = vld [vmem:[%s1255 + $0xd9] sm:$0xff]
        %v1468 = vld [vmem:[%s1255 + $0xe1] sm:$0xff]
        %v1469 = vld [vmem:[%s1255 + $0xf1] sm:$0xff]
        %v1470 = vld [vmem:[%s1255 + $0xf9] sm:$0xff]
        %v1471 = vld [vmem:[%s1255 + $0x109] sm:$0xff]
        %v1472 = vld [vmem:[%s1255 + $0x111] sm:$0xff]
        %v1473 = vld [vmem:[%s1255 + $0x121] sm:$0xff]
        %v1474 = vld [vmem:[%s1255 + $0x129] sm:$0xff]
        %v1475 = vld [vmem:[%s1255 + $0x139] sm:$0xff]
        %v1476 = vld [vmem:[%s1255 + $0x141] sm:$0xff]
        %v1477 = vld [vmem:[%s1255 + $0x151] sm:$0xff]
        %v1478 = vld [vmem:[%s1255 + $0x159] sm:$0xff]
        %v1479 = vld [vmem:[%s1255 + $0x169] sm:$0xff]
        %v1480 = vld [vmem:[%s1255 + $0x171] sm:$0xff]
        %1513 = vrot.lane.b32.xlu0 %v1449, 28
        %v1514 = vpop.permute.xlu0 %1513
        %1515 = vrot.lane.b32.xlu0 %v1450, 28
        %v1516 = vpop.permute.xlu0 %1515
        %1517 = vrot.lane.b32.xlu0 %v1451, 28
        %v1518 = vpop.permute.xlu0 %1517
        %1519 = vrot.lane.b32.xlu0 %v1452, 28
        %v1520 = vpop.permute.xlu0 %1519
        %1521 = vrot.lane.b32.xlu0 %v1453, 28
        %v1522 = vpop.permute.xlu0 %1521
        %1523 = vrot.lane.b32.xlu0 %v1454, 28
        %v1524 = vpop.permute.xlu0 %1523
        %1525 = vrot.lane.b32.xlu0 %v1455, 28
        %v1526 = vpop.permute.xlu0 %1525
        %1527 = vrot.lane.b32.xlu0 %v1456, 28
        %v1528 = vpop.permute.xlu0 %1527
        %1529 = vrot.lane.b32.xlu0 %v1457, 28
        %v1530 = vpop.permute.xlu0 %1529
        %1531 = vrot.lane.b32.xlu0 %v1458, 28
        %v1532 = vpop.permute.xlu0 %1531
        %1533 = vrot.lane.b32.xlu0 %v1459, 28
        %v1534 = vpop.permute.xlu0 %1533
        %1535 = vrot.lane.b32.xlu0 %v1460, 28
        %v1536 = vpop.permute.xlu0 %1535
        %1537 = vrot.lane.b32.xlu0 %v1461, 28
        %v1538 = vpop.permute.xlu0 %1537
        %1539 = vrot.lane.b32.xlu0 %v1462, 28
        %v1540 = vpop.permute.xlu0 %1539
        %1541 = vrot.lane.b32.xlu0 %v1463, 28
        %v1542 = vpop.permute.xlu0 %1541
        %1543 = vrot.lane.b32.xlu0 %v1464, 28
        %v1544 = vpop.permute.xlu0 %1543
        %1545 = vrot.lane.b32.xlu0 %v1465, 28
        %v1546 = vpop.permute.xlu0 %1545
        %1547 = vrot.lane.b32.xlu0 %v1466, 28
        %v1548 = vpop.permute.xlu0 %1547
        %1549 = vrot.lane.b32.xlu0 %v1467, 28
        %v1550 = vpop.permute.xlu0 %1549
        %1551 = vrot.lane.b32.xlu0 %v1468, 28
        %v1552 = vpop.permute.xlu0 %1551
        %1553 = vrot.lane.b32.xlu0 %v1469, 28
        %v1554 = vpop.permute.xlu0 %1553
        %1555 = vrot.lane.b32.xlu0 %v1470, 28
        %v1556 = vpop.permute.xlu0 %1555
        %1557 = vrot.lane.b32.xlu0 %v1471, 28
        %v1558 = vpop.permute.xlu0 %1557
        %1559 = vrot.lane.b32.xlu0 %v1472, 28
        %v1560 = vpop.permute.xlu0 %1559
        %1561 = vrot.lane.b32.xlu0 %v1473, 28
        %v1562 = vpop.permute.xlu0 %1561
        %1563 = vrot.lane.b32.xlu0 %v1474, 28
        %v1564 = vpop.permute.xlu0 %1563
        %1565 = vrot.lane.b32.xlu0 %v1475, 28
        %v1566 = vpop.permute.xlu0 %1565
        %1567 = vrot.lane.b32.xlu0 %v1476, 28
        %v1568 = vpop.permute.xlu0 %1567
        %1569 = vrot.lane.b32.xlu0 %v1477, 28
        %v1570 = vpop.permute.xlu0 %1569
        %1571 = vrot.lane.b32.xlu0 %v1478, 28
        %v1572 = vpop.permute.xlu0 %1571
        %1573 = vrot.lane.b32.xlu0 %v1479, 28
        %v1574 = vpop.permute.xlu0 %1573
        %1575 = vrot.lane.b32.xlu0 %v1480, 28
        %v1576 = vpop.permute.xlu0 %1575
        %vm1609 = vcmask 261344
        %1610 = vst.msk [vmem:[#allocation2] sm:$0xff] %vm1609, %v1514
        %1611 = vst.msk [vmem:[#allocation2 + $0x8] sm:$0xff] %vm1609, %v1516
        %1612 = vst.msk [vmem:[#allocation2 + $0x10] sm:$0xff] %vm1609, %v1518
        %1613 = vst.msk [vmem:[#allocation2 + $0x18] sm:$0xff] %vm1609, %v1520
        %1614 = vst.msk [vmem:[#allocation2 + $0x20] sm:$0xff] %vm1609, %v1522
        %1615 = vst.msk [vmem:[#allocation2 + $0x28] sm:$0xff] %vm1609, %v1524
        %1616 = vst.msk [vmem:[#allocation2 + $0x30] sm:$0xff] %vm1609, %v1526
        %1617 = vst.msk [vmem:[#allocation2 + $0x38] sm:$0xff] %vm1609, %v1528
        %1618 = vst.msk [vmem:[#allocation2 + $0x40] sm:$0xff] %vm1609, %v1530
        %1619 = vst.msk [vmem:[#allocation2 + $0x48] sm:$0xff] %vm1609, %v1532
        %1620 = vst.msk [vmem:[#allocation2 + $0x50] sm:$0xff] %vm1609, %v1534
        %1621 = vst.msk [vmem:[#allocation2 + $0x58] sm:$0xff] %vm1609, %v1536
        %1622 = vst.msk [vmem:[#allocation2 + $0x60] sm:$0xff] %vm1609, %v1538
        %1623 = vst.msk [vmem:[#allocation2 + $0x68] sm:$0xff] %vm1609, %v1540
        %1624 = vst.msk [vmem:[#allocation2 + $0x70] sm:$0xff] %vm1609, %v1542
        %1625 = vst.msk [vmem:[#allocation2 + $0x78] sm:$0xff] %vm1609, %v1544
        %1626 = vst.msk [vmem:[#allocation2 + $0x80] sm:$0xff] %vm1609, %v1546
        %1627 = vst.msk [vmem:[#allocation2 + $0x88] sm:$0xff] %vm1609, %v1548
        %1628 = vst.msk [vmem:[#allocation2 + $0x90] sm:$0xff] %vm1609, %v1550
        %1629 = vst.msk [vmem:[#allocation2 + $0x98] sm:$0xff] %vm1609, %v1552
        %1630 = vst.msk [vmem:[#allocation2 + $0xa0] sm:$0xff] %vm1609, %v1554
        %1631 = vst.msk [vmem:[#allocation2 + $0xa8] sm:$0xff] %vm1609, %v1556
        %1632 = vst.msk [vmem:[#allocation2 + $0xb0] sm:$0xff] %vm1609, %v1558
        %1633 = vst.msk [vmem:[#allocation2 + $0xb8] sm:$0xff] %vm1609, %v1560
        %1634 = vst.msk [vmem:[#allocation2 + $0xc0] sm:$0xff] %vm1609, %v1562
        %1635 = vst.msk [vmem:[#allocation2 + $0xc8] sm:$0xff] %vm1609, %v1564
        %1636 = vst.msk [vmem:[#allocation2 + $0xd0] sm:$0xff] %vm1609, %v1566
        %1637 = vst.msk [vmem:[#allocation2 + $0xd8] sm:$0xff] %vm1609, %v1568
        %1638 = vst.msk [vmem:[#allocation2 + $0xe0] sm:$0xff] %vm1609, %v1570
        %1639 = vst.msk [vmem:[#allocation2 + $0xe8] sm:$0xff] %vm1609, %v1572
        %1640 = vst.msk [vmem:[#allocation2 + $0xf0] sm:$0xff] %vm1609, %v1574
        %1641 = vst.msk [vmem:[#allocation2 + $0xf8] sm:$0xff] %vm1609, %v1576
        %v1642 = vld [vmem:[%s1255 + $0x2] sm:$0xff]
        %v1643 = vld [vmem:[%s1255 + $0xa] sm:$0xff]
        %v1644 = vld [vmem:[%s1255 + $0x1a] sm:$0xff]
        %v1645 = vld [vmem:[%s1255 + $0x22] sm:$0xff]
        %v1646 = vld [vmem:[%s1255 + $0x32] sm:$0xff]
        %v1647 = vld [vmem:[%s1255 + $0x3a] sm:$0xff]
        %v1648 = vld [vmem:[%s1255 + $0x4a] sm:$0xff]
        %v1649 = vld [vmem:[%s1255 + $0x52] sm:$0xff]
        %v1650 = vld [vmem:[%s1255 + $0x62] sm:$0xff]
        %v1651 = vld [vmem:[%s1255 + $0x6a] sm:$0xff]
        %v1652 = vld [vmem:[%s1255 + $0x7a] sm:$0xff]
        %v1653 = vld [vmem:[%s1255 + $0x82] sm:$0xff]
        %v1654 = vld [vmem:[%s1255 + $0x92] sm:$0xff]
        %v1655 = vld [vmem:[%s1255 + $0x9a] sm:$0xff]
        %v1656 = vld [vmem:[%s1255 + $0xaa] sm:$0xff]
        %v1657 = vld [vmem:[%s1255 + $0xb2] sm:$0xff]
        %v1658 = vld [vmem:[%s1255 + $0xc2] sm:$0xff]
        %v1659 = vld [vmem:[%s1255 + $0xca] sm:$0xff]
        %v1660 = vld [vmem:[%s1255 + $0xda] sm:$0xff]
        %v1661 = vld [vmem:[%s1255 + $0xe2] sm:$0xff]
        %v1662 = vld [vmem:[%s1255 + $0xf2] sm:$0xff]
        %v1663 = vld [vmem:[%s1255 + $0xfa] sm:$0xff]
        %v1664 = vld [vmem:[%s1255 + $0x10a] sm:$0xff]
        %v1665 = vld [vmem:[%s1255 + $0x112] sm:$0xff]
        %v1666 = vld [vmem:[%s1255 + $0x122] sm:$0xff]
        %v1667 = vld [vmem:[%s1255 + $0x12a] sm:$0xff]
        %v1668 = vld [vmem:[%s1255 + $0x13a] sm:$0xff]
        %v1669 = vld [vmem:[%s1255 + $0x142] sm:$0xff]
        %v1670 = vld [vmem:[%s1255 + $0x152] sm:$0xff]
        %v1671 = vld [vmem:[%s1255 + $0x15a] sm:$0xff]
        %v1672 = vld [vmem:[%s1255 + $0x16a] sm:$0xff]
        %v1673 = vld [vmem:[%s1255 + $0x172] sm:$0xff]
        %1706 = vrot.lane.b32.xlu0 %v1642, 32
        %v1707 = vpop.permute.xlu0 %1706
        %1708 = vrot.lane.b32.xlu0 %v1643, 32
        %v1709 = vpop.permute.xlu0 %1708
        %1710 = vrot.lane.b32.xlu0 %v1644, 32
        %v1711 = vpop.permute.xlu0 %1710
        %1712 = vrot.lane.b32.xlu0 %v1645, 32
        %v1713 = vpop.permute.xlu0 %1712
        %1714 = vrot.lane.b32.xlu0 %v1646, 32
        %v1715 = vpop.permute.xlu0 %1714
        %1716 = vrot.lane.b32.xlu0 %v1647, 32
        %v1717 = vpop.permute.xlu0 %1716
        %1718 = vrot.lane.b32.xlu0 %v1648, 32
        %v1719 = vpop.permute.xlu0 %1718
        %1720 = vrot.lane.b32.xlu0 %v1649, 32
        %v1721 = vpop.permute.xlu0 %1720
        %1722 = vrot.lane.b32.xlu0 %v1650, 32
        %v1723 = vpop.permute.xlu0 %1722
        %1724 = vrot.lane.b32.xlu0 %v1651, 32
        %v1725 = vpop.permute.xlu0 %1724
        %1726 = vrot.lane.b32.xlu0 %v1652, 32
        %v1727 = vpop.permute.xlu0 %1726
        %1728 = vrot.lane.b32.xlu0 %v1653, 32
        %v1729 = vpop.permute.xlu0 %1728
        %1730 = vrot.lane.b32.xlu0 %v1654, 32
        %v1731 = vpop.permute.xlu0 %1730
        %1732 = vrot.lane.b32.xlu0 %v1655, 32
        %v1733 = vpop.permute.xlu0 %1732
        %1734 = vrot.lane.b32.xlu0 %v1656, 32
        %v1735 = vpop.permute.xlu0 %1734
        %1736 = vrot.lane.b32.xlu0 %v1657, 32
        %v1737 = vpop.permute.xlu0 %1736
        %1738 = vrot.lane.b32.xlu0 %v1658, 32
        %v1739 = vpop.permute.xlu0 %1738
        %1740 = vrot.lane.b32.xlu0 %v1659, 32
        %v1741 = vpop.permute.xlu0 %1740
        %1742 = vrot.lane.b32.xlu0 %v1660, 32
        %v1743 = vpop.permute.xlu0 %1742
        %1744 = vrot.lane.b32.xlu0 %v1661, 32
        %v1745 = vpop.permute.xlu0 %1744
        %1746 = vrot.lane.b32.xlu0 %v1662, 32
        %v1747 = vpop.permute.xlu0 %1746
        %1748 = vrot.lane.b32.xlu0 %v1663, 32
        %v1749 = vpop.permute.xlu0 %1748
        %1750 = vrot.lane.b32.xlu0 %v1664, 32
        %v1751 = vpop.permute.xlu0 %1750
        %1752 = vrot.lane.b32.xlu0 %v1665, 32
        %v1753 = vpop.permute.xlu0 %1752
        %1754 = vrot.lane.b32.xlu0 %v1666, 32
        %v1755 = vpop.permute.xlu0 %1754
        %1756 = vrot.lane.b32.xlu0 %v1667, 32
        %v1757 = vpop.permute.xlu0 %1756
        %1758 = vrot.lane.b32.xlu0 %v1668, 32
        %v1759 = vpop.permute.xlu0 %1758
        %1760 = vrot.lane.b32.xlu0 %v1669, 32
        %v1761 = vpop.permute.xlu0 %1760
        %1762 = vrot.lane.b32.xlu0 %v1670, 32
        %v1763 = vpop.permute.xlu0 %1762
        %1764 = vrot.lane.b32.xlu0 %v1671, 32
        %v1765 = vpop.permute.xlu0 %1764
        %1766 = vrot.lane.b32.xlu0 %v1672, 32
        %v1767 = vpop.permute.xlu0 %1766
        %1768 = vrot.lane.b32.xlu0 %v1673, 32
        %v1769 = vpop.permute.xlu0 %1768
        %vm1802 = vcmask 294144
        %1803 = vst.msk [vmem:[#allocation2] sm:$0xff] %vm1802, %v1707
        %1804 = vst.msk [vmem:[#allocation2 + $0x8] sm:$0xff] %vm1802, %v1709
        %1805 = vst.msk [vmem:[#allocation2 + $0x10] sm:$0xff] %vm1802, %v1711
        %1806 = vst.msk [vmem:[#allocation2 + $0x18] sm:$0xff] %vm1802, %v1713
        %1807 = vst.msk [vmem:[#allocation2 + $0x20] sm:$0xff] %vm1802, %v1715
        %1808 = vst.msk [vmem:[#allocation2 + $0x28] sm:$0xff] %vm1802, %v1717
        %1809 = vst.msk [vmem:[#allocation2 + $0x30] sm:$0xff] %vm1802, %v1719
        %1810 = vst.msk [vmem:[#allocation2 + $0x38] sm:$0xff] %vm1802, %v1721
        %1811 = vst.msk [vmem:[#allocation2 + $0x40] sm:$0xff] %vm1802, %v1723
        %1812 = vst.msk [vmem:[#allocation2 + $0x48] sm:$0xff] %vm1802, %v1725
        %1813 = vst.msk [vmem:[#allocation2 + $0x50] sm:$0xff] %vm1802, %v1727
        %1814 = vst.msk [vmem:[#allocation2 + $0x58] sm:$0xff] %vm1802, %v1729
        %1815 = vst.msk [vmem:[#allocation2 + $0x60] sm:$0xff] %vm1802, %v1731
        %1816 = vst.msk [vmem:[#allocation2 + $0x68] sm:$0xff] %vm1802, %v1733
        %1817 = vst.msk [vmem:[#allocation2 + $0x70] sm:$0xff] %vm1802, %v1735
        %1818 = vst.msk [vmem:[#allocation2 + $0x78] sm:$0xff] %vm1802, %v1737
        %1819 = vst.msk [vmem:[#allocation2 + $0x80] sm:$0xff] %vm1802, %v1739
        %1820 = vst.msk [vmem:[#allocation2 + $0x88] sm:$0xff] %vm1802, %v1741
        %1821 = vst.msk [vmem:[#allocation2 + $0x90] sm:$0xff] %vm1802, %v1743
        %1822 = vst.msk [vmem:[#allocation2 + $0x98] sm:$0xff] %vm1802, %v1745
        %1823 = vst.msk [vmem:[#allocation2 + $0xa0] sm:$0xff] %vm1802, %v1747
        %1824 = vst.msk [vmem:[#allocation2 + $0xa8] sm:$0xff] %vm1802, %v1749
        %1825 = vst.msk [vmem:[#allocation2 + $0xb0] sm:$0xff] %vm1802, %v1751
        %1826 = vst.msk [vmem:[#allocation2 + $0xb8] sm:$0xff] %vm1802, %v1753
        %1827 = vst.msk [vmem:[#allocation2 + $0xc0] sm:$0xff] %vm1802, %v1755
        %1828 = vst.msk [vmem:[#allocation2 + $0xc8] sm:$0xff] %vm1802, %v1757
        %1829 = vst.msk [vmem:[#allocation2 + $0xd0] sm:$0xff] %vm1802, %v1759
        %1830 = vst.msk [vmem:[#allocation2 + $0xd8] sm:$0xff] %vm1802, %v1761
        %1831 = vst.msk [vmem:[#allocation2 + $0xe0] sm:$0xff] %vm1802, %v1763
        %1832 = vst.msk [vmem:[#allocation2 + $0xe8] sm:$0xff] %vm1802, %v1765
        %1833 = vst.msk [vmem:[#allocation2 + $0xf0] sm:$0xff] %vm1802, %v1767
        %1834 = vst.msk [vmem:[#allocation2 + $0xf8] sm:$0xff] %vm1802, %v1769
        %v1835 = vld [vmem:[#allocation2] sm:$0xff]
        %v1836 = vld [vmem:[#allocation2 + $0x8] sm:$0xff]
        %v1837 = vld [vmem:[#allocation2 + $0x10] sm:$0xff]
        %v1838 = vld [vmem:[#allocation2 + $0x18] sm:$0xff]
        %v1839 = vld [vmem:[#allocation2 + $0x20] sm:$0xff]
        %v1840 = vld [vmem:[#allocation2 + $0x28] sm:$0xff]
        %v1841 = vld [vmem:[#allocation2 + $0x30] sm:$0xff]
        %v1842 = vld [vmem:[#allocation2 + $0x38] sm:$0xff]
        %v1843 = vld [vmem:[#allocation2 + $0x40] sm:$0xff]
        %v1844 = vld [vmem:[#allocation2 + $0x48] sm:$0xff]
        %v1845 = vld [vmem:[#allocation2 + $0x50] sm:$0xff]
        %v1846 = vld [vmem:[#allocation2 + $0x58] sm:$0xff]
        %v1847 = vld [vmem:[#allocation2 + $0x60] sm:$0xff]
        %v1848 = vld [vmem:[#allocation2 + $0x68] sm:$0xff]
        %v1849 = vld [vmem:[#allocation2 + $0x70] sm:$0xff]
        %v1850 = vld [vmem:[#allocation2 + $0x78] sm:$0xff]
        %v1851 = vld [vmem:[#allocation2 + $0x80] sm:$0xff]
        %v1852 = vld [vmem:[#allocation2 + $0x88] sm:$0xff]
        %v1853 = vld [vmem:[#allocation2 + $0x90] sm:$0xff]
        %v1854 = vld [vmem:[#allocation2 + $0x98] sm:$0xff]
        %v1855 = vld [vmem:[#allocation2 + $0xa0] sm:$0xff]
        %v1856 = vld [vmem:[#allocation2 + $0xa8] sm:$0xff]
        %v1857 = vld [vmem:[#allocation2 + $0xb0] sm:$0xff]
        %v1858 = vld [vmem:[#allocation2 + $0xb8] sm:$0xff]
        %v1859 = vld [vmem:[#allocation2 + $0xc0] sm:$0xff]
        %v1860 = vld [vmem:[#allocation2 + $0xc8] sm:$0xff]
        %v1861 = vld [vmem:[#allocation2 + $0xd0] sm:$0xff]
        %v1862 = vld [vmem:[#allocation2 + $0xd8] sm:$0xff]
        %v1863 = vld [vmem:[#allocation2 + $0xe0] sm:$0xff]
        %v1864 = vld [vmem:[#allocation2 + $0xe8] sm:$0xff]
        %v1865 = vld [vmem:[#allocation2 + $0xf0] sm:$0xff]
        %v1866 = vld [vmem:[#allocation2 + $0xf8] sm:$0xff]
        %v1867 = vld [vmem:[%s1] sm:$0xff]
        %v1868 = vld [vmem:[%s1 + $0x8] sm:$0xff]
        %v1869 = vld [vmem:[%s1 + $0x10] sm:$0xff]
        %v1870 = vld [vmem:[%s1 + $0x18] sm:$0xff]
        %v1871 = vld [vmem:[%s1 + $0x20] sm:$0xff]
        %v1872 = vld [vmem:[%s1 + $0x28] sm:$0xff]
        %v1873 = vld [vmem:[%s1 + $0x30] sm:$0xff]
        %v1874 = vld [vmem:[%s1 + $0x38] sm:$0xff]
        %v1875 = vld [vmem:[%s1 + $0x40] sm:$0xff]
        %v1876 = vld [vmem:[%s1 + $0x48] sm:$0xff]
        %v1877 = vld [vmem:[%s1 + $0x50] sm:$0xff]
        %v1878 = vld [vmem:[%s1 + $0x58] sm:$0xff]
        %v1879 = vld [vmem:[%s1 + $0x60] sm:$0xff]
        %v1880 = vld [vmem:[%s1 + $0x68] sm:$0xff]
        %v1881 = vld [vmem:[%s1 + $0x70] sm:$0xff]
        %v1882 = vld [vmem:[%s1 + $0x78] sm:$0xff]
        %v1883 = vld [vmem:[%s2] sm:$0x1]
        %v1885 = vperm.slane %v1883, 0
        %1887 = vmatpush.msra.mxu0 %v1882
        %1888 = vmatpush.msra.mxu0 %v1881
        %1889 = vmatpush.msra.mxu0 %v1880
        %1890 = vmatpush.msra.mxu0 %v1879
        %1891 = vmatpush.msra.mxu0 %v1878
        %1892 = vmatpush.msra.mxu0 %v1877
        %1893 = vmatpush.msra.mxu0 %v1876
        %1894 = vmatpush.msra.mxu0 %v1875
        %1895 = vmatpush.msra.mxu0 %v1874
        %1896 = vmatpush.msra.mxu0 %v1873
        %1897 = vmatpush.msra.mxu0 %v1872
        %1898 = vmatpush.msra.mxu0 %v1871
        %1899 = vmatpush.msra.mxu0 %v1870
        %1900 = vmatpush.msra.mxu0 %v1869
        %1901 = vmatpush.msra.mxu0 %v1868
        %1902 = vmatpush.msra.mxu0 %v1867
        %1903 = vmatmul.f32.gmra.mxu0 %v1835
        %v1904 = vpop.f32.mrf.mxu0
        %v1905 = vadd.f32 %v1885, %v1904
        %1906 = vmatmul.f32.gmra.mxu0 %v1836
        %v1907 = vpop.f32.mrf.mxu0
        %v1908 = vadd.f32 %v1885, %v1907
        %1909 = vmatmul.f32.gmra.mxu0 %v1837
        %v1910 = vpop.f32.mrf.mxu0
        %v1911 = vadd.f32 %v1885, %v1910
        %1912 = vmatmul.f32.gmra.mxu0 %v1838
        %v1913 = vpop.f32.mrf.mxu0
        %v1914 = vadd.f32 %v1885, %v1913
        %1915 = vmatmul.f32.gmra.mxu0 %v1839
        %v1916 = vpop.f32.mrf.mxu0
        %v1917 = vadd.f32 %v1885, %v1916
        %1918 = vmatmul.f32.gmra.mxu0 %v1840
        %v1919 = vpop.f32.mrf.mxu0
        %v1920 = vadd.f32 %v1885, %v1919
        %1921 = vmatmul.f32.gmra.mxu0 %v1841
        %v1922 = vpop.f32.mrf.mxu0
        %v1923 = vadd.f32 %v1885, %v1922
        %1924 = vmatmul.f32.gmra.mxu0 %v1842
        %v1925 = vpop.f32.mrf.mxu0
        %v1926 = vadd.f32 %v1885, %v1925
        %1927 = vmatmul.f32.gmra.mxu0 %v1843
        %v1928 = vpop.f32.mrf.mxu0
        %v1929 = vadd.f32 %v1885, %v1928
        %1930 = vmatmul.f32.gmra.mxu0 %v1844
        %v1931 = vpop.f32.mrf.mxu0
        %v1932 = vadd.f32 %v1885, %v1931
        %1933 = vmatmul.f32.gmra.mxu0 %v1845
        %v1934 = vpop.f32.mrf.mxu0
        %v1935 = vadd.f32 %v1885, %v1934
        %1936 = vmatmul.f32.gmra.mxu0 %v1846
        %v1937 = vpop.f32.mrf.mxu0
        %v1938 = vadd.f32 %v1885, %v1937
        %1939 = vmatmul.f32.gmra.mxu0 %v1847
        %v1940 = vpop.f32.mrf.mxu0
        %v1941 = vadd.f32 %v1885, %v1940
        %1942 = vmatmul.f32.gmra.mxu0 %v1848
        %v1943 = vpop.f32.mrf.mxu0
        %v1944 = vadd.f32 %v1885, %v1943
        %1945 = vmatmul.f32.gmra.mxu0 %v1849
        %v1946 = vpop.f32.mrf.mxu0
        %v1947 = vadd.f32 %v1885, %v1946
        %1948 = vmatmul.f32.gmra.mxu0 %v1850
        %v1949 = vpop.f32.mrf.mxu0
        %v1950 = vadd.f32 %v1885, %v1949
        %1951 = vmatmul.f32.gmra.mxu0 %v1851
        %v1952 = vpop.f32.mrf.mxu0
        %v1953 = vadd.f32 %v1885, %v1952
        %1954 = vmatmul.f32.gmra.mxu0 %v1852
        %v1955 = vpop.f32.mrf.mxu0
        %v1956 = vadd.f32 %v1885, %v1955
        %1957 = vmatmul.f32.gmra.mxu0 %v1853
        %v1958 = vpop.f32.mrf.mxu0
        %v1959 = vadd.f32 %v1885, %v1958
        %1960 = vmatmul.f32.gmra.mxu0 %v1854
        %v1961 = vpop.f32.mrf.mxu0
        %v1962 = vadd.f32 %v1885, %v1961
        %1963 = vmatmul.f32.gmra.mxu0 %v1855
        %v1964 = vpop.f32.mrf.mxu0
        %v1965 = vadd.f32 %v1885, %v1964
        %1966 = vmatmul.f32.gmra.mxu0 %v1856
        %v1967 = vpop.f32.mrf.mxu0
        %v1968 = vadd.f32 %v1885, %v1967
        %1969 = vmatmul.f32.gmra.mxu0 %v1857
        %v1970 = vpop.f32.mrf.mxu0
        %v1971 = vadd.f32 %v1885, %v1970
        %1972 = vmatmul.f32.gmra.mxu0 %v1858
        %v1973 = vpop.f32.mrf.mxu0
        %v1974 = vadd.f32 %v1885, %v1973
        %1975 = vmatmul.f32.gmra.mxu0 %v1859
        %v1976 = vpop.f32.mrf.mxu0
        %v1977 = vadd.f32 %v1885, %v1976
        %1978 = vmatmul.f32.gmra.mxu0 %v1860
        %v1979 = vpop.f32.mrf.mxu0
        %v1980 = vadd.f32 %v1885, %v1979
        %1981 = vmatmul.f32.gmra.mxu0 %v1861
        %v1982 = vpop.f32.mrf.mxu0
        %v1983 = vadd.f32 %v1885, %v1982
        %1984 = vmatmul.f32.gmra.mxu0 %v1862
        %v1985 = vpop.f32.mrf.mxu0
        %v1986 = vadd.f32 %v1885, %v1985
        %1987 = vmatmul.f32.gmra.mxu0 %v1863
        %v1988 = vpop.f32.mrf.mxu0
        %v1989 = vadd.f32 %v1885, %v1988
        %1990 = vmatmul.f32.gmra.mxu0 %v1864
        %v1991 = vpop.f32.mrf.mxu0
        %v1992 = vadd.f32 %v1885, %v1991
        %1993 = vmatmul.f32.gmra.mxu0 %v1865
        %v1994 = vpop.f32.mrf.mxu0
        %v1995 = vadd.f32 %v1885, %v1994
        %1996 = vmatmul.f32.gmra.mxu0 %v1866
        %v1997 = vpop.f32.mrf.mxu0
        %v1998 = vadd.f32 %v1885, %v1997
        %1999 = vdwg.mxu0
        %2000 = vst [vmem:[%s177] sm:$0xff] %v1905
        %2001 = vst [vmem:[%s177 + $0x8] sm:$0xff] %v1908
        %2002 = vst [vmem:[%s177 + $0x10] sm:$0xff] %v1911
        %2003 = vst [vmem:[%s177 + $0x18] sm:$0xff] %v1914
        %2004 = vst [vmem:[%s177 + $0x20] sm:$0xff] %v1917
        %2005 = vst [vmem:[%s177 + $0x28] sm:$0xff] %v1920
        %2006 = vst [vmem:[%s177 + $0x30] sm:$0xff] %v1923
        %2007 = vst [vmem:[%s177 + $0x38] sm:$0xff] %v1926
        %2008 = vst [vmem:[%s177 + $0x40] sm:$0xff] %v1929
        %2009 = vst [vmem:[%s177 + $0x48] sm:$0xff] %v1932
        %2010 = vst [vmem:[%s177 + $0x50] sm:$0xff] %v1935
        %2011 = vst [vmem:[%s177 + $0x58] sm:$0xff] %v1938
        %2012 = vst [vmem:[%s177 + $0x60] sm:$0xff] %v1941
        %2013 = vst [vmem:[%s177 + $0x68] sm:$0xff] %v1944
        %2014 = vst [vmem:[%s177 + $0x70] sm:$0xff] %v1947
        %2015 = vst [vmem:[%s177 + $0x78] sm:$0xff] %v1950
        %2016 = vst [vmem:[%s177 + $0x80] sm:$0xff] %v1953
        %2017 = vst [vmem:[%s177 + $0x88] sm:$0xff] %v1956
        %2018 = vst [vmem:[%s177 + $0x90] sm:$0xff] %v1959
        %2019 = vst [vmem:[%s177 + $0x98] sm:$0xff] %v1962
        %2020 = vst [vmem:[%s177 + $0xa0] sm:$0xff] %v1965
        %2021 = vst [vmem:[%s177 + $0xa8] sm:$0xff] %v1968
        %2022 = vst [vmem:[%s177 + $0xb0] sm:$0xff] %v1971
        %2023 = vst [vmem:[%s177 + $0xb8] sm:$0xff] %v1974
        %2024 = vst [vmem:[%s177 + $0xc0] sm:$0xff] %v1977
        %2025 = vst [vmem:[%s177 + $0xc8] sm:$0xff] %v1980
        %2026 = vst [vmem:[%s177 + $0xd0] sm:$0xff] %v1983
        %2027 = vst [vmem:[%s177 + $0xd8] sm:$0xff] %v1986
        %2028 = vst [vmem:[%s177 + $0xe0] sm:$0xff] %v1989
        %2029 = vst [vmem:[%s177 + $0xe8] sm:$0xff] %v1992
        %2030 = vst [vmem:[%s177 + $0xf0] sm:$0xff] %v1995
        %2031 = vst [vmem:[%s177 + $0xf8] sm:$0xff] %v1998
        %s2032 = sand.u32 %s107, 1
        %s2033 = scalar_lea.sflag [#allocation4], %s2032
        %s2034 = sand.u32 %s107, 1
        %s2035 = smul.addr %s2034, 256
        %s2036 = scalar_lea.vmem [#allocation3], %s2035
        // Predicated region
        $region33: #{tpu_custom_call.1} parent=31 // pred_check
          %p2037 = pneg %p117
        $region34: #{tpu_custom_call.1} parent=31 // pred_check_branch
          %2039 = sbr.rel (%p2037) target = $region36
        $region35: #{tpu_custom_call.1} parent=31 // pred_region
          %s2040 = smul.u32 32, %s22
          %2042 = vsyncadd %s2033, 0
          %s2043 = smul.addr %s21, 32
          %s2044 = sadd.s32 %s2040, %s2043
          %s2045 = smul.addr %s2044, 8
          %s2046 = scalar_lea.hbm %s3, %s2045
          %s2047 = sshll.u32 %s2036, 4
          %s2048 = int_to_ptr.vmem [resolvable:$true] %s2047
          %s2049 = sshll.u32 %s2046, 4
          %s2050 = int_to_ptr.hbm [resolvable:$true] %s2049
          %2055 = dma.vmem_to_hbm [thread:$0]  %s2048, 4096, %s2050, %s2033, 128, 128, 8
        $region36: #{tpu_custom_call.1} parent=31 // pred_fallthru
          _
      $region32: #{tpu_custom_call.1} parent=5 // pred_fallthru
        _
      %p2056 = scmp.le.s32.totalorder 2, %s12
      // Predicated region
      $region37: #{tpu_custom_call.1} parent=5 // pred_check
        %p2057 = pneg %p2056
      $region38: #{tpu_custom_call.1} parent=5 // pred_check_branch
        %2059 = sbr.rel (%p2057) target = $region40
      $region39: #{tpu_custom_call.1} parent=5 // pred_region
        %s2060 = ssub.s32 %s12, 2
        // Predicated region
        $region41: #{tpu_custom_call.1} parent=39 // pred_check
          %p2061 = pneg %p123
        $region42: #{tpu_custom_call.1} parent=39 // pred_check_branch
          %2063 = sbr.rel (%p2061) target = $region44
        $region43: #{tpu_custom_call.1} parent=39 // pred_region
          %s2064 = sand.u32 %s108, 1
          %s2065 = scalar_lea.sflag [#allocation4], %s2064
          %s2066 = sand.u32 %s108, 1
          %s2067 = smul.addr %s2066, 256
          %s2068 = scalar_lea.vmem [#allocation3], %s2067
          %2070 = dma.done %s2065, 4096
        $region44: #{tpu_custom_call.1} parent=39 // pred_fallthru
          _
      $region40: #{tpu_custom_call.1} parent=5 // pred_fallthru
        _
    $region6: #{tpu_custom_call.1} parent=1 // loop_footer
      %s16 = sadd.s32 1, %s12
    $region7: #{tpu_custom_call.1} parent=1 // loop_footer_branch
      %11 = sbr.rel target = $region3
    $region8: #{tpu_custom_call.1} parent=1 // loop_exit
      _
    %2071 = vsyncpa [#allocation4], 1
    %s2072 = scalar_lea.sflag [#allocation4], 1
    %2073 = vsyncpa %s2072, 1

</llo_original>
